<compile_context>
chip_gen: v7x
topology: tpu7x:2x2x1
jax: 0.10.0
libtpu: 0.0.40
codegen_flags: <defaults>
</compile_context>

<pallas_src>
import functools

import numpy as np

import jax
import jax.numpy as jnp
from jax.experimental import pallas as pl
from jax.experimental.pallas import tpu as pltpu

_BF16 = jnp.bfloat16
_F32 = jnp.float32


# ----------------------------------------------------------------------------
# Host-side weight / constant preparation
# ----------------------------------------------------------------------------
def _prep_qkv_weights(wqkv_t, bqkv, num_heads):
    """Permute qkv columns to [Q_all | K_all | V_all], heads contiguous; bf16 W."""
    E = wqkv_t.shape[0]
    Dh = E // num_heads
    base = np.arange(num_heads)[:, None] * (3 * Dh) + np.arange(Dh)[None, :]
    perm = np.concatenate(
        [base.reshape(-1), (base + Dh).reshape(-1), (base + 2 * Dh).reshape(-1)])
    wqkv_p = jnp.asarray(wqkv_t)[:, perm].astype(_BF16)
    bqkv_p = jnp.asarray(bqkv)[perm].reshape(1, -1).astype(_F32)
    return wqkv_p, bqkv_p


def _prep_constants(E, num_heads, Dh, bblk, seq):
    """Static 0/1 matrices (exact in bf16): head pooling and batch-segment sum."""
    pool = np.kron(np.eye(num_heads, dtype=np.float32),
                   np.ones((Dh, 1), np.float32))                     # (E, H)
    zero = np.zeros_like(pool)
    pool2 = np.block([[pool, zero], [zero, pool]])                   # (2E, 2H)
    batch_of_row = np.repeat(np.arange(bblk), seq)                   # (bblk*seq,)
    eb = (batch_of_row[:, None] == np.arange(bblk)[None, :]).astype(np.float32)

    def b(a):
        return jnp.asarray(np.ascontiguousarray(a), dtype=_BF16)

    return (b(pool), b(pool.T), b(pool2), b(pool2.T), b(eb), b(eb.T))


def _vmem_limit_bytes():
    """Chip-aware scoped VMEM limit (v7x 64 MiB phys, v5e/v6e 128 MiB phys)."""
    cap = 64 * 1024 * 1024
    try:
        cap = int(pltpu.get_tpu_info().vmem_capacity_bytes)
    except Exception:
        pass
    return int(min(max(cap - 16 * 1024 * 1024, 32 * 1024 * 1024), 96 * 1024 * 1024))


def _pick_batch_block(B, S, E, hid, vmem_limit, batch_block=None):
    """Largest legal divisor of B that fits the VMEM budget, keeping grid >= 2."""
    if batch_block is not None:
        return batch_block
    # Rough live-f32 footprint per slab row (qkv, qk, v, seq-sums, r, MLP hidden).
    bytes_per_row = 4 * (22 * E + 2 * max(hid, E))
    target_rows = max(8, (vmem_limit // 2) // max(bytes_per_row, 1))
    divs = [d for d in range(1, B + 1) if B % d == 0]
    legal = [d for d in divs if (d * S) % 8 == 0]          # (8,128) sublane rule
    fitting = [d for d in legal if d * S <= target_rows]
    multi = [d for d in fitting if B // d >= 2]            # >=2 steps for megacore
    if multi:
        return max(multi)
    if fitting:
        return max(fitting)
    if legal:
        return min(legal)   # smallest legal block — never silently jump to B*S
    return B                # Mblk == B*S equals the full array extent (always legal)


def _const_spec(shape):
    """Constant-per-grid-step operand: single-buffered when supported."""
    idx = lambda i: (0,) * len(shape)
    try:
        return pl.BlockSpec(shape, idx, pipeline_mode=pl.Buffered(1))
    except Exception:
        return pl.BlockSpec(shape, idx)


# ----------------------------------------------------------------------------
# Flow-attention math (operates on a (Bblk*S, E) row slab inside the kernel)
# ----------------------------------------------------------------------------
def _flow_attention_math(x, wqkv, bqkv, wout, bout, pool, poolT, pool2, pool2T,
                         eb, ebT, *, num_heads):
    M, E = x.shape
    H = num_heads
    Dh = E // H
    f32 = jnp.float32

    def mm(a, b):
        # Every matmul is a native bf16 MXU matmul with f32 accumulation.
        return jnp.dot(a.astype(_BF16), b.astype(_BF16),
                       preferred_element_type=f32)

    def seq_sum(a):
        # Per-batch (segment) sum over the sequence, broadcast back to every row,
        # done on the MXU:  Eb @ (Eb^T @ a)  with exact bf16 0/1 factors.
        return mm(eb, mm(ebT, a))

    def swap_halves(a):
        return jnp.concatenate([a[:, E:], a[:, :E]], axis=1)

    # qkv projection (bf16 in, f32 accumulation); columns pre-permuted [Q|K|V].
    qkv = mm(x, wqkv) + bqkv
    qk = jax.nn.sigmoid(qkv[:, :2 * E])        # ONE full-width sigmoid over [Q|K]
    v = qkv[:, 2 * E:]

    # i = sum_d q * sum_s k ; o = sum_d k * sum_s q  -> one fused pool2 matmul.
    s1 = swap_halves(seq_sum(qk))              # [Σ_s k | Σ_s q]
    io = mm(qk * s1, pool2)                    # (M, 2H) = [i | o]
    inv = mm(pl.reciprocal(io, approx=True), pool2T)   # (M, 2E) = [1/i | 1/o] tiled
    qiko = qk * inv                            # [q/i | k/o]
    s2 = swap_halves(seq_sum(qiko))            # [Σ_s k/o | Σ_s q/i]
    hats = mm(qk * s2, pool2)                  # (M, 2H) = [i_hat | o_hat]
    i_hat = hats[:, :H]
    o_hat = hats[:, H:]

    # Softmax of o_hat over the sequence per (batch, head).  A single shift over
    # the whole batch block is valid by shift-invariance.
    e = jnp.exp(o_hat - jnp.max(o_hat, axis=0, keepdims=True))
    sm = e * pl.reciprocal(seq_sum(e), approx=True)    # (M, H)

    # Fused broadcast back over Dh of the gate and the softmax weights.
    gsm = mm(jnp.concatenate([jax.nn.sigmoid(i_hat), sm], axis=1), pool2T)
    gate = gsm[:, :E]
    vsm = v * gsm[:, E:]

    qi = qiko[:, :E]
    k = qk[:, E:]

    # Cross-head contraction.  NOTE: the reference contracts over the HEAD axis
    # at each (b, s) position — matmul(q/i, matmul(k^T, v*sm)) in the (B,S,H,Dh)
    # layout, NOT standard per-head attention.  Do not "fix" this.
    # Head replication is a lane concat (VPU/XLU); only the Dh-pool / head
    # broadcast contractions use the MXU (bf16 0/1 factors).
    r = jnp.zeros((M, E), f32)
    for hp in range(H):
        lo = hp * Dh
        if H > 1:
            k_rep = jnp.concatenate([k[:, lo:lo + Dh]] * H, axis=1)
            v_rep = jnp.concatenate([vsm[:, lo:lo + Dh]] * H, axis=1)
        else:
            k_rep, v_rep = k, vsm
        c = mm(qi * k_rep, pool)               # (M, H)
        r = r + mm(c, poolT) * v_rep
    values = r * gate

    # Output projection.
    return mm(values, wout) + bout


# ----------------------------------------------------------------------------
# Kernels
# ----------------------------------------------------------------------------
def _flow_attention_kernel(x_ref, wqkv_ref, bqkv_ref, wout_ref, bout_ref,
                           pool_ref, poolT_ref, pool2_ref, pool2T_ref,
                           eb_ref, ebT_ref, out_ref, *, num_heads):
    out = _flow_attention_math(
        x_ref[...], wqkv_ref[...], bqkv_ref[...], wout_ref[...], bout_ref[...],
        pool_ref[...], poolT_ref[...], pool2_ref[...], pool2T_ref[...],
        eb_ref[...], ebT_ref[...], num_heads=num_heads)
    out_ref[...] = out.astype(out_ref.dtype)


def _attention_block_kernel(x_ref, wqkv_ref, bqkv_ref, wout_ref, bout_ref,
                            pool_ref, poolT_ref, pool2_ref, pool2T_ref,
                            eb_ref, ebT_ref, w1_ref, b1_ref, w2_ref, b2_ref,
                            alpha_ref, out_ref, *, num_heads, rezero, layer_norm):
    f32 = jnp.float32
    x = x_ref[...].astype(f32)

    def l2norm(t):
        return t * jax.lax.rsqrt(jnp.sum(t * t, axis=-1, keepdims=True) + 1e-9)

    if layer_norm == 'pre':
        x = l2norm(x)

    attn = _flow_attention_math(
        x, wqkv_ref[...], bqkv_ref[...], wout_ref[...], bout_ref[...],
        pool_ref[...], poolT_ref[...], pool2_ref[...], pool2T_ref[...],
        eb_ref[...], ebT_ref[...], num_heads=num_heads)

    if rezero:
        a_attn = alpha_ref[0:1, 0:1]
        a_mlp = alpha_ref[0:1, 1:2]
        z = x + a_attn * attn
    else:
        z = x + attn
    if layer_norm:
        z = l2norm(z)

    h = jnp.dot(z.astype(_BF16), w1_ref[...],
                preferred_element_type=f32) + b1_ref[...]
    # TODO(synk): torch.nn.functional.gelu defaults to exact erf-GELU; the tanh
    #             approximation is used here (erf is not reliably lowered).
    h = jax.nn.gelu(h, approximate=True)
    mlp = jnp.dot(h.astype(_BF16), w2_ref[...],
                  preferred_element_type=f32) + b2_ref[...]
    if rezero:
        z = z + a_mlp * mlp
    else:
        z = z + mlp
    if layer_norm == 'post':
        z = l2norm(z)

    out_ref[...] = (x + z).astype(out_ref.dtype)


# ----------------------------------------------------------------------------
# Wrappers
# ----------------------------------------------------------------------------
def flow_attention(x, wqkv_t, bqkv, wout_t, bout, num_heads, *, batch_block=None):
    """x: (B,S,E); wqkv_t: (E,3E); bqkv: (3E,); wout_t: (E,E); bout: (E,)."""
    B, S, E = x.shape
    assert E % num_heads == 0
    Dh = E // num_heads
    vmem_limit = _vmem_limit_bytes()
    bblk = _pick_batch_block(B, S, E, 0, vmem_limit, batch_block)
    Mblk = bblk * S

    wqkv_p, bqkv_p = _prep_qkv_weights(wqkv_t, bqkv, num_heads)
    wout_b = jnp.asarray(wout_t).astype(_BF16)
    bout_b = jnp.asarray(bout).reshape(1, -1).astype(_F32)
    pool, poolT, pool2, pool2T, eb, ebT = _prep_constants(E, num_heads, Dh, bblk, S)

    kernel = functools.partial(_flow_attention_kernel, num_heads=num_heads)
    out2 = pl.pallas_call(
        kernel,
        out_shape=jax.ShapeDtypeStruct((B * S, E), x.dtype),
        grid=(B // bblk,),
        in_specs=[
            pl.BlockSpec((Mblk, E), lambda i: (i, 0)),   # x rows (bf16 stream)
            _const_spec((E, 3 * E)),                     # Wqkv^T (permuted, bf16)
            _const_spec((1, 3 * E)),                     # bqkv (permuted)
            _const_spec((E, E)),                         # Wout^T (bf16)
            _const_spec((1, E)),                         # bout
            _const_spec((E, num_heads)),                 # head-pool P
            _const_spec((num_heads, E)),                 # P^T
            _const_spec((2 * E, 2 * num_heads)),         # block-diag pool2
            _const_spec((2 * num_heads, 2 * E)),         # pool2^T
            _const_spec((Mblk, bblk)),                   # batch-segment Eb
            _const_spec((bblk, Mblk)),                   # Eb^T
        ],
        out_specs=pl.BlockSpec((Mblk, E), lambda i: (i, 0)),
        compiler_params=pltpu.CompilerParams(
            dimension_semantics=("parallel",),
            vmem_limit_bytes=vmem_limit),
    )(x.reshape(B * S, E).astype(_BF16), wqkv_p, bqkv_p, wout_b, bout_b,
      pool, poolT, pool2, pool2T, eb, ebT)
    return out2.reshape(B, S, E)


def attention_block(x, params, *, num_heads=4, attn_block='rezero',
                    layer_norm='pre', batch_block=None):
    """Full AttentionBlock forward (self_attn='linear-flow')."""
    B, S, E = x.shape
    assert E % num_heads == 0
    Dh = E // num_heads
    hid = params['w1_t'].shape[1]
    vmem_limit = _vmem_limit_bytes()
    bblk = _pick_batch_block(B, S, E, hid, vmem_limit, batch_block)
    Mblk = bblk * S

    wqkv_p, bqkv_p = _prep_qkv_weights(params['wqkv_t'], params['bqkv'], num_heads)
    wout_b = jnp.asarray(params['wout_t']).astype(_BF16)
    bout_b = jnp.asarray(params['bout']).reshape(1, -1).astype(_F32)
    w1_b = jnp.asarray(params['w1_t']).astype(_BF16)
    b1_b = jnp.asarray(params['b1']).reshape(1, -1).astype(_F32)
    w2_b = jnp.asarray(params['w2_t']).astype(_BF16)
    b2_b = jnp.asarray(params['b2']).reshape(1, -1).astype(_F32)
    alphas = jnp.asarray([[params.get('alpha_attn', 0.0),
                           params.get('alpha_mlp', 0.0)]], _F32)
    pool, poolT, pool2, pool2T, eb, ebT = _prep_constants(E, num_heads, Dh, bblk, S)

    kernel = functools.partial(_attention_block_kernel, num_heads=num_heads,
                               rezero=(attn_block == 'rezero'),
                               layer_norm=layer_norm)
    out2 = pl.pallas_call(
        kernel,
        out_shape=jax.ShapeDtypeStruct((B * S, E), x.dtype),
        grid=(B // bblk,),
        in_specs=[
            pl.BlockSpec((Mblk, E), lambda i: (i, 0)),
            _const_spec((E, 3 * E)),
            _const_spec((1, 3 * E)),
            _const_spec((E, E)),
            _const_spec((1, E)),
            _const_spec((E, num_heads)),
            _const_spec((num_heads, E)),
            _const_spec((2 * E, 2 * num_heads)),
            _const_spec((2 * num_heads, 2 * E)),
            _const_spec((Mblk, bblk)),
            _const_spec((bblk, Mblk)),
            _const_spec((E, hid)),                       # linear1 W^T (bf16)
            _const_spec((1, hid)),                       # linear1 b
            _const_spec((hid, E)),                       # linear2 W^T (bf16)
            _const_spec((1, E)),                         # linear2 b
            _const_spec((1, 2)),                         # rezero alphas
        ],
        out_specs=pl.BlockSpec((Mblk, E), lambda i: (i, 0)),
        compiler_params=pltpu.CompilerParams(
            dimension_semantics=("parallel",),
            vmem_limit_bytes=vmem_limit),
    )(x.reshape(B * S, E).astype(_BF16), wqkv_p, bqkv_p, wout_b, bout_b,
      pool, poolT, pool2, pool2T, eb, ebT, w1_b, b1_b, w2_b, b2_b, alphas)
    return out2.reshape(B, S, E)


# ----------------------------------------------------------------------------
# Pure-JAX references (f32) for verification
# ----------------------------------------------------------------------------
def flow_attention_ref(x, wqkv_t, bqkv, wout_t, bout, num_heads):
    B, S, E = x.shape
    Dh = E // num_heads
    qkv = x @ wqkv_t + bqkv
    qkv = qkv.reshape(B, S, num_heads, 3 * Dh)
    q, k, v = jnp.split(qkv, 3, axis=-1)
    q = jax.nn.sigmoid(q)
    k = jax.nn.sigmoid(k)
    i = jnp.sum(q * jnp.sum(k, axis=1, keepdims=True), axis=3, keepdims=True)
    o = jnp.sum(k * jnp.sum(q, axis=1, keepdims=True), axis=3, keepdims=True)
    i_hat = jnp.sum(q * jnp.sum(k / o, axis=1, keepdims=True), axis=3, keepdims=True)
    o_hat = jnp.sum(k * jnp.sum(q / i, axis=1, keepdims=True), axis=3, keepdims=True)
    sm = jax.nn.softmax(o_hat, axis=1)
    r = jnp.matmul(q / i, jnp.matmul(jnp.swapaxes(k, -2, -1), v * sm))
    r = r * jax.nn.sigmoid(i_hat)
    values = r.reshape(B, S, E)
    return values @ wout_t + bout


def attention_block_ref(x, params, num_heads, attn_block, layer_norm):
    def norm(t):
        return t / jnp.sqrt(jnp.sum(t * t, axis=-1, keepdims=True) + 1e-9)

    rezero = attn_block == 'rezero'
    if layer_norm == 'pre':
        x = norm(x)
    a = flow_attention_ref(x, params['wqkv_t'], params['bqkv'],
                           params['wout_t'], params['bout'], num_heads)
    z = x + (params['alpha_attn'] * a if rezero else a)
    if layer_norm:
        z = norm(z)
    h = jax.nn.gelu(z @ params['w1_t'] + params['b1'], approximate=True)
    mlp = h @ params['w2_t'] + params['b2']
    z = z + (params['alpha_mlp'] * mlp if rezero else mlp)
    if layer_norm == 'post':
        z = norm(z)
    return x + z


# ----------------------------------------------------------------------------
# Self-test
# ----------------------------------------------------------------------------
if __name__ == "__main__":
    B, S, E, H, HID = 2, 8, 32, 4, 64

    key = jax.random.PRNGKey(0)
    k_x, k_wqkv, k_wout, k_w1, k_w2, k_b = jax.random.split(key, 6)

    lim_qkv = (6.0 / (E + 3 * E)) ** 0.5
    wqkv_t = jax.random.uniform(k_wqkv, (E, 3 * E), jnp.float32, -lim_qkv, lim_qkv)
    bqkv = jnp.zeros((3 * E,), jnp.float32)
    lim_out = (6.0 / (2 * E)) ** 0.5
    wout_t = jax.random.uniform(k_wout, (E, E), jnp.float32, -lim_out, lim_out)
    bout = jnp.zeros((E,), jnp.float32)
    lim1 = (6.0 / (E + HID)) ** 0.5
    w1_t = jax.random.uniform(k_w1, (E, HID), jnp.float32, -lim1, lim1)
    w2_t = jax.random.uniform(k_w2, (HID, E), jnp.float32, -lim1, lim1)
    b1, b2 = jnp.split(
        jax.random.uniform(k_b, (HID + E,), jnp.float32, -0.1, 0.1), [HID])

    x = jax.random.normal(k_x, (B, S, E), jnp.float32)

    # 1) FlowAttention alone (bf16 matmuls + approx reciprocal -> ~1e-2 tolerance).
    out_attn = jax.block_until_ready(
        flow_attention(x, wqkv_t, bqkv, wout_t, bout, H))
    ref_attn = flow_attention_ref(x, wqkv_t, bqkv, wout_t, bout, H)
    assert out_attn.shape == (B, S, E)
    err = float(jnp.max(jnp.abs(out_attn - ref_attn)))
    assert jnp.allclose(out_attn, ref_attn, rtol=2e-2, atol=2e-2), \
        f"flow attention max abs err {err}"

    # 2) Full AttentionBlock (linear-flow) in rezero/pre and plain/post configs.
    params = dict(wqkv_t=wqkv_t, bqkv=bqkv, wout_t=wout_t, bout=bout,
                  w1_t=w1_t, b1=b1, w2_t=w2_t, b2=b2,
                  alpha_attn=jnp.float32(0.5), alpha_mlp=jnp.float32(-0.25))
    for cfg_block, cfg_norm in [('rezero', 'pre'), ('plain', 'post')]:
        out_blk = jax.block_until_ready(
            attention_block(x, params, num_heads=H,
                            attn_block=cfg_block, layer_norm=cfg_norm))
        ref_blk = attention_block_ref(x, params, H, cfg_block, cfg_norm)
        assert out_blk.shape == (B, S, E)
        err = float(jnp.max(jnp.abs(out_blk - ref_blk)))
        assert jnp.allclose(out_blk, ref_blk, rtol=2e-2, atol=2e-2), \
            f"attention block ({cfg_block},{cfg_norm}) max abs err {err}"

    print("KERNEL_OK")
</pallas_src>

<mosaic_0001>
module attributes {stable_mosaic.version = 11 : i64} {
  func.func @_flow_attention_kernel(%arg0: i32, %arg1: memref<8x32xbf16, #tpu.memory_space<vmem>>, %arg2: memref<32x96xbf16, #tpu.memory_space<vmem>>, %arg3: memref<1x96xf32, #tpu.memory_space<vmem>>, %arg4: memref<32x32xbf16, #tpu.memory_space<vmem>>, %arg5: memref<1x32xf32, #tpu.memory_space<vmem>>, %arg6: memref<32x4xbf16, #tpu.memory_space<vmem>>, %arg7: memref<4x32xbf16, #tpu.memory_space<vmem>>, %arg8: memref<64x8xbf16, #tpu.memory_space<vmem>>, %arg9: memref<8x64xbf16, #tpu.memory_space<vmem>>, %arg10: memref<8x1xbf16, #tpu.memory_space<vmem>>, %arg11: memref<1x8xbf16, #tpu.memory_space<vmem>>, %arg12: memref<8x32xf32, #tpu.memory_space<vmem>>) attributes {dimension_semantics = [#tpu.dimension_semantics<parallel>], iteration_bounds = array<i64: 2>, scalar_prefetch = 0 : i64, scratch_operands = 0 : i64, tpu.core_type = #tpu.core_type<tc>, window_params = [{transform_indices = @transform_0, window_bounds = array<i64: 8, 32>}, {pipeline_mode = #tpu.pipeline_mode<synchronous>, transform_indices = @transform_1, window_bounds = array<i64: 32, 96>}, {pipeline_mode = #tpu.pipeline_mode<synchronous>, transform_indices = @transform_2, window_bounds = array<i64: 1, 96>}, {pipeline_mode = #tpu.pipeline_mode<synchronous>, transform_indices = @transform_3, window_bounds = array<i64: 32, 32>}, {pipeline_mode = #tpu.pipeline_mode<synchronous>, transform_indices = @transform_4, window_bounds = array<i64: 1, 32>}, {pipeline_mode = #tpu.pipeline_mode<synchronous>, transform_indices = @transform_5, window_bounds = array<i64: 32, 4>}, {pipeline_mode = #tpu.pipeline_mode<synchronous>, transform_indices = @transform_6, window_bounds = array<i64: 4, 32>}, {pipeline_mode = #tpu.pipeline_mode<synchronous>, transform_indices = @transform_7, window_bounds = array<i64: 64, 8>}, {pipeline_mode = #tpu.pipeline_mode<synchronous>, transform_indices = @transform_8, window_bounds = array<i64: 8, 64>}, {pipeline_mode = #tpu.pipeline_mode<synchronous>, transform_indices = @transform_9, window_bounds = array<i64: 8, 1>}, {pipeline_mode = #tpu.pipeline_mode<synchronous>, transform_indices = @transform_10, window_bounds = array<i64: 1, 8>}, {transform_indices = @transform_11, window_bounds = array<i64: 8, 32>}]} {
    %c0 = arith.constant 0 : index
    %c0_0 = arith.constant 0 : index
    %0 = vector.load %arg1[%c0, %c0_0] : memref<8x32xbf16, #tpu.memory_space<vmem>>, vector<8x32xbf16>
    %c0_1 = arith.constant 0 : index
    %c0_2 = arith.constant 0 : index
    %1 = vector.load %arg2[%c0_1, %c0_2] : memref<32x96xbf16, #tpu.memory_space<vmem>>, vector<32x96xbf16>
    %c0_3 = arith.constant 0 : index
    %c0_4 = arith.constant 0 : index
    %2 = vector.load %arg3[%c0_3, %c0_4] : memref<1x96xf32, #tpu.memory_space<vmem>>, vector<1x96xf32>
    %c0_5 = arith.constant 0 : index
    %c0_6 = arith.constant 0 : index
    %3 = vector.load %arg4[%c0_5, %c0_6] : memref<32x32xbf16, #tpu.memory_space<vmem>>, vector<32x32xbf16>
    %c0_7 = arith.constant 0 : index
    %c0_8 = arith.constant 0 : index
    %4 = vector.load %arg5[%c0_7, %c0_8] : memref<1x32xf32, #tpu.memory_space<vmem>>, vector<1x32xf32>
    %c0_9 = arith.constant 0 : index
    %c0_10 = arith.constant 0 : index
    %5 = vector.load %arg6[%c0_9, %c0_10] : memref<32x4xbf16, #tpu.memory_space<vmem>>, vector<32x4xbf16>
    %c0_11 = arith.constant 0 : index
    %c0_12 = arith.constant 0 : index
    %6 = vector.load %arg7[%c0_11, %c0_12] : memref<4x32xbf16, #tpu.memory_space<vmem>>, vector<4x32xbf16>
    %c0_13 = arith.constant 0 : index
    %c0_14 = arith.constant 0 : index
    %7 = vector.load %arg8[%c0_13, %c0_14] : memref<64x8xbf16, #tpu.memory_space<vmem>>, vector<64x8xbf16>
    %c0_15 = arith.constant 0 : index
    %c0_16 = arith.constant 0 : index
    %8 = vector.load %arg9[%c0_15, %c0_16] : memref<8x64xbf16, #tpu.memory_space<vmem>>, vector<8x64xbf16>
    %c0_17 = arith.constant 0 : index
    %c0_18 = arith.constant 0 : index
    %9 = vector.load %arg10[%c0_17, %c0_18] : memref<8x1xbf16, #tpu.memory_space<vmem>>, vector<8x1xbf16>
    %c0_19 = arith.constant 0 : index
    %c0_20 = arith.constant 0 : index
    %10 = vector.load %arg11[%c0_19, %c0_20] : memref<1x8xbf16, #tpu.memory_space<vmem>>, vector<1x8xbf16>
    %cst = arith.constant dense<0.000000e+00> : vector<8x96xf32>
    %11 = tpu.matmul %0, %1, %cst {dimension_numbers = #tpu.dot_dimension_numbers<[1], [0], [0], [1], [0, 0, 1, 1], [], []>} : vector<8x32xbf16>, vector<32x96xbf16>, vector<8x96xf32> -> vector<8x96xf32>
    %12 = vector.broadcast %2 : vector<1x96xf32> to vector<8x96xf32>
    %13 = arith.addf %11, %12 : vector<8x96xf32>
    %14 = vector.extract_strided_slice %13 {offsets = [0, 0], sizes = [8, 64], strides = [1, 1]} : vector<8x96xf32> to vector<8x64xf32>
    %15 = arith.negf %14 : vector<8x64xf32>
    %16 = math.exp %15 : vector<8x64xf32>
    %cst_21 = arith.constant 1.000000e+00 : f32
    %17 = vector.broadcast %cst_21 : f32 to vector<8x64xf32>
    %18 = arith.addf %17, %16 : vector<8x64xf32>
    %19 = arith.divf %17, %18 : vector<8x64xf32>
    %20 = vector.extract_strided_slice %13 {offsets = [0, 64], sizes = [8, 32], strides = [1, 1]} : vector<8x96xf32> to vector<8x32xf32>
    %21 = arith.truncf %19 : vector<8x64xf32> to vector<8x64xbf16>
    %cst_22 = arith.constant dense<0.000000e+00> : vector<1x64xf32>
    %22 = tpu.matmul %10, %21, %cst_22 {dimension_numbers = #tpu.dot_dimension_numbers<[1], [0], [0], [1], [0, 0, 1, 1], [], []>} : vector<1x8xbf16>, vector<8x64xbf16>, vector<1x64xf32> -> vector<1x64xf32>
    %23 = arith.truncf %22 : vector<1x64xf32> to vector<1x64xbf16>
    %cst_23 = arith.constant dense<0.000000e+00> : vector<8x64xf32>
    %24 = tpu.matmul %9, %23, %cst_23 {dimension_numbers = #tpu.dot_dimension_numbers<[1], [0], [0], [1], [0, 0, 1, 1], [], []>} : vector<8x1xbf16>, vector<1x64xbf16>, vector<8x64xf32> -> vector<8x64xf32>
    %25 = vector.extract_strided_slice %24 {offsets = [0, 32], sizes = [8, 32], strides = [1, 1]} : vector<8x64xf32> to vector<8x32xf32>
    %26 = vector.extract_strided_slice %24 {offsets = [0, 0], sizes = [8, 32], strides = [1, 1]} : vector<8x64xf32> to vector<8x32xf32>
    %27 = tpu.concatenate %25, %26 in 1 : vector<8x32xf32>, vector<8x32xf32> -> vector<8x64xf32>
    %28 = arith.mulf %19, %27 : vector<8x64xf32>
    %29 = arith.truncf %28 : vector<8x64xf32> to vector<8x64xbf16>
    %cst_24 = arith.constant dense<0.000000e+00> : vector<8x8xf32>
    %30 = tpu.matmul %29, %7, %cst_24 {dimension_numbers = #tpu.dot_dimension_numbers<[1], [0], [0], [1], [0, 0, 1, 1], [], []>} : vector<8x64xbf16>, vector<64x8xbf16>, vector<8x8xf32> -> vector<8x8xf32>
    %31 = tpu.reciprocal %30 {approx = true} : vector<8x8xf32> -> vector<8x8xf32>
    %32 = arith.truncf %31 : vector<8x8xf32> to vector<8x8xbf16>
    %cst_25 = arith.constant dense<0.000000e+00> : vector<8x64xf32>
    %33 = tpu.matmul %32, %8, %cst_25 {dimension_numbers = #tpu.dot_dimension_numbers<[1], [0], [0], [1], [0, 0, 1, 1], [], []>} : vector<8x8xbf16>, vector<8x64xbf16>, vector<8x64xf32> -> vector<8x64xf32>
    %34 = arith.mulf %19, %33 : vector<8x64xf32>
    %35 = arith.truncf %34 : vector<8x64xf32> to vector<8x64xbf16>
    %cst_26 = arith.constant dense<0.000000e+00> : vector<1x64xf32>
    %36 = tpu.matmul %10, %35, %cst_26 {dimension_numbers = #tpu.dot_dimension_numbers<[1], [0], [0], [1], [0, 0, 1, 1], [], []>} : vector<1x8xbf16>, vector<8x64xbf16>, vector<1x64xf32> -> vector<1x64xf32>
    %37 = arith.truncf %36 : vector<1x64xf32> to vector<1x64xbf16>
    %cst_27 = arith.constant dense<0.000000e+00> : vector<8x64xf32>
    %38 = tpu.matmul %9, %37, %cst_27 {dimension_numbers = #tpu.dot_dimension_numbers<[1], [0], [0], [1], [0, 0, 1, 1], [], []>} : vector<8x1xbf16>, vector<1x64xbf16>, vector<8x64xf32> -> vector<8x64xf32>
    %39 = vector.extract_strided_slice %38 {offsets = [0, 32], sizes = [8, 32], strides = [1, 1]} : vector<8x64xf32> to vector<8x32xf32>
    %40 = vector.extract_strided_slice %38 {offsets = [0, 0], sizes = [8, 32], strides = [1, 1]} : vector<8x64xf32> to vector<8x32xf32>
    %41 = tpu.concatenate %39, %40 in 1 : vector<8x32xf32>, vector<8x32xf32> -> vector<8x64xf32>
    %42 = arith.mulf %19, %41 : vector<8x64xf32>
    %43 = arith.truncf %42 : vector<8x64xf32> to vector<8x64xbf16>
    %cst_28 = arith.constant dense<0.000000e+00> : vector<8x8xf32>
    %44 = tpu.matmul %43, %7, %cst_28 {dimension_numbers = #tpu.dot_dimension_numbers<[1], [0], [0], [1], [0, 0, 1, 1], [], []>} : vector<8x64xbf16>, vector<64x8xbf16>, vector<8x8xf32> -> vector<8x8xf32>
    %45 = vector.extract_strided_slice %44 {offsets = [0, 0], sizes = [8, 4], strides = [1, 1]} : vector<8x8xf32> to vector<8x4xf32>
    %46 = vector.extract_strided_slice %44 {offsets = [0, 4], sizes = [8, 4], strides = [1, 1]} : vector<8x8xf32> to vector<8x4xf32>
    %cst_29 = arith.constant dense<0xFF800000> : vector<4xf32>
    %47 = vector.multi_reduction <maximumf>, %46, %cst_29 [0] : vector<8x4xf32> to vector<4xf32>
    %48 = vector.shape_cast %47 : vector<4xf32> to vector<1x4xf32>
    %49 = vector.broadcast %48 : vector<1x4xf32> to vector<8x4xf32>
    %50 = arith.subf %46, %49 : vector<8x4xf32>
    %51 = math.exp %50 : vector<8x4xf32>
    %52 = arith.truncf %51 : vector<8x4xf32> to vector<8x4xbf16>
    %cst_30 = arith.constant dense<0.000000e+00> : vector<1x4xf32>
    %53 = tpu.matmul %10, %52, %cst_30 {dimension_numbers = #tpu.dot_dimension_numbers<[1], [0], [0], [1], [0, 0, 1, 1], [], []>} : vector<1x8xbf16>, vector<8x4xbf16>, vector<1x4xf32> -> vector<1x4xf32>
    %54 = arith.truncf %53 : vector<1x4xf32> to vector<1x4xbf16>
    %cst_31 = arith.constant dense<0.000000e+00> : vector<8x4xf32>
    %55 = tpu.matmul %9, %54, %cst_31 {dimension_numbers = #tpu.dot_dimension_numbers<[1], [0], [0], [1], [0, 0, 1, 1], [], []>} : vector<8x1xbf16>, vector<1x4xbf16>, vector<8x4xf32> -> vector<8x4xf32>
    %56 = tpu.reciprocal %55 {approx = true} : vector<8x4xf32> -> vector<8x4xf32>
    %57 = arith.mulf %51, %56 : vector<8x4xf32>
    %58 = arith.negf %45 : vector<8x4xf32>
    %59 = math.exp %58 : vector<8x4xf32>
    %cst_32 = arith.constant 1.000000e+00 : f32
    %60 = vector.broadcast %cst_32 : f32 to vector<8x4xf32>
    %61 = arith.addf %60, %59 : vector<8x4xf32>
    %62 = arith.divf %60, %61 : vector<8x4xf32>
    %63 = tpu.concatenate %62, %57 in 1 : vector<8x4xf32>, vector<8x4xf32> -> vector<8x8xf32>
    %64 = arith.truncf %63 : vector<8x8xf32> to vector<8x8xbf16>
    %cst_33 = arith.constant dense<0.000000e+00> : vector<8x64xf32>
    %65 = tpu.matmul %64, %8, %cst_33 {dimension_numbers = #tpu.dot_dimension_numbers<[1], [0], [0], [1], [0, 0, 1, 1], [], []>} : vector<8x8xbf16>, vector<8x64xbf16>, vector<8x64xf32> -> vector<8x64xf32>
    %66 = vector.extract_strided_slice %65 {offsets = [0, 0], sizes = [8, 32], strides = [1, 1]} : vector<8x64xf32> to vector<8x32xf32>
    %67 = vector.extract_strided_slice %65 {offsets = [0, 32], sizes = [8, 32], strides = [1, 1]} : vector<8x64xf32> to vector<8x32xf32>
    %68 = arith.mulf %20, %67 : vector<8x32xf32>
    %69 = vector.extract_strided_slice %34 {offsets = [0, 0], sizes = [8, 32], strides = [1, 1]} : vector<8x64xf32> to vector<8x32xf32>
    %70 = vector.extract_strided_slice %19 {offsets = [0, 32], sizes = [8, 32], strides = [1, 1]} : vector<8x64xf32> to vector<8x32xf32>
    %cst_34 = arith.constant 0.000000e+00 : f32
    %71 = vector.broadcast %cst_34 : f32 to vector<8x32xf32>
    %72 = vector.extract_strided_slice %70 {offsets = [0, 0], sizes = [8, 8], strides = [1, 1]} : vector<8x32xf32> to vector<8x8xf32>
    %73 = tpu.concatenate %72, %72, %72, %72 in 1 : vector<8x8xf32>, vector<8x8xf32>, vector<8x8xf32>, vector<8x8xf32> -> vector<8x32xf32>
    %74 = vector.extract_strided_slice %68 {offsets = [0, 0], sizes = [8, 8], strides = [1, 1]} : vector<8x32xf32> to vector<8x8xf32>
    %75 = tpu.concatenate %74, %74, %74, %74 in 1 : vector<8x8xf32>, vector<8x8xf32>, vector<8x8xf32>, vector<8x8xf32> -> vector<8x32xf32>
    %76 = arith.mulf %69, %73 : vector<8x32xf32>
    %77 = arith.truncf %76 : vector<8x32xf32> to vector<8x32xbf16>
    %cst_35 = arith.constant dense<0.000000e+00> : vector<8x4xf32>
    %78 = tpu.matmul %77, %5, %cst_35 {dimension_numbers = #tpu.dot_dimension_numbers<[1], [0], [0], [1], [0, 0, 1, 1], [], []>} : vector<8x32xbf16>, vector<32x4xbf16>, vector<8x4xf32> -> vector<8x4xf32>
    %79 = arith.truncf %78 : vector<8x4xf32> to vector<8x4xbf16>
    %cst_36 = arith.constant dense<0.000000e+00> : vector<8x32xf32>
    %80 = tpu.matmul %79, %6, %cst_36 {dimension_numbers = #tpu.dot_dimension_numbers<[1], [0], [0], [1], [0, 0, 1, 1], [], []>} : vector<8x4xbf16>, vector<4x32xbf16>, vector<8x32xf32> -> vector<8x32xf32>
    %81 = arith.mulf %80, %75 : vector<8x32xf32>
    %82 = arith.addf %71, %81 : vector<8x32xf32>
    %83 = vector.extract_strided_slice %70 {offsets = [0, 8], sizes = [8, 8], strides = [1, 1]} : vector<8x32xf32> to vector<8x8xf32>
    %84 = tpu.concatenate %83, %83, %83, %83 in 1 : vector<8x8xf32>, vector<8x8xf32>, vector<8x8xf32>, vector<8x8xf32> -> vector<8x32xf32>
    %85 = vector.extract_strided_slice %68 {offsets = [0, 8], sizes = [8, 8], strides = [1, 1]} : vector<8x32xf32> to vector<8x8xf32>
    %86 = tpu.concatenate %85, %85, %85, %85 in 1 : vector<8x8xf32>, vector<8x8xf32>, vector<8x8xf32>, vector<8x8xf32> -> vector<8x32xf32>
    %87 = arith.mulf %69, %84 : vector<8x32xf32>
    %88 = arith.truncf %87 : vector<8x32xf32> to vector<8x32xbf16>
    %cst_37 = arith.constant dense<0.000000e+00> : vector<8x4xf32>
    %89 = tpu.matmul %88, %5, %cst_37 {dimension_numbers = #tpu.dot_dimension_numbers<[1], [0], [0], [1], [0, 0, 1, 1], [], []>} : vector<8x32xbf16>, vector<32x4xbf16>, vector<8x4xf32> -> vector<8x4xf32>
    %90 = arith.truncf %89 : vector<8x4xf32> to vector<8x4xbf16>
    %cst_38 = arith.constant dense<0.000000e+00> : vector<8x32xf32>
    %91 = tpu.matmul %90, %6, %cst_38 {dimension_numbers = #tpu.dot_dimension_numbers<[1], [0], [0], [1], [0, 0, 1, 1], [], []>} : vector<8x4xbf16>, vector<4x32xbf16>, vector<8x32xf32> -> vector<8x32xf32>
    %92 = arith.mulf %91, %86 : vector<8x32xf32>
    %93 = arith.addf %82, %92 : vector<8x32xf32>
    %94 = vector.extract_strided_slice %70 {offsets = [0, 16], sizes = [8, 8], strides = [1, 1]} : vector<8x32xf32> to vector<8x8xf32>
    %95 = tpu.concatenate %94, %94, %94, %94 in 1 : vector<8x8xf32>, vector<8x8xf32>, vector<8x8xf32>, vector<8x8xf32> -> vector<8x32xf32>
    %96 = vector.extract_strided_slice %68 {offsets = [0, 16], sizes = [8, 8], strides = [1, 1]} : vector<8x32xf32> to vector<8x8xf32>
    %97 = tpu.concatenate %96, %96, %96, %96 in 1 : vector<8x8xf32>, vector<8x8xf32>, vector<8x8xf32>, vector<8x8xf32> -> vector<8x32xf32>
    %98 = arith.mulf %69, %95 : vector<8x32xf32>
    %99 = arith.truncf %98 : vector<8x32xf32> to vector<8x32xbf16>
    %cst_39 = arith.constant dense<0.000000e+00> : vector<8x4xf32>
    %100 = tpu.matmul %99, %5, %cst_39 {dimension_numbers = #tpu.dot_dimension_numbers<[1], [0], [0], [1], [0, 0, 1, 1], [], []>} : vector<8x32xbf16>, vector<32x4xbf16>, vector<8x4xf32> -> vector<8x4xf32>
    %101 = arith.truncf %100 : vector<8x4xf32> to vector<8x4xbf16>
    %cst_40 = arith.constant dense<0.000000e+00> : vector<8x32xf32>
    %102 = tpu.matmul %101, %6, %cst_40 {dimension_numbers = #tpu.dot_dimension_numbers<[1], [0], [0], [1], [0, 0, 1, 1], [], []>} : vector<8x4xbf16>, vector<4x32xbf16>, vector<8x32xf32> -> vector<8x32xf32>
    %103 = arith.mulf %102, %97 : vector<8x32xf32>
    %104 = arith.addf %93, %103 : vector<8x32xf32>
    %105 = vector.extract_strided_slice %70 {offsets = [0, 24], sizes = [8, 8], strides = [1, 1]} : vector<8x32xf32> to vector<8x8xf32>
    %106 = tpu.concatenate %105, %105, %105, %105 in 1 : vector<8x8xf32>, vector<8x8xf32>, vector<8x8xf32>, vector<8x8xf32> -> vector<8x32xf32>
    %107 = vector.extract_strided_slice %68 {offsets = [0, 24], sizes = [8, 8], strides = [1, 1]} : vector<8x32xf32> to vector<8x8xf32>
    %108 = tpu.concatenate %107, %107, %107, %107 in 1 : vector<8x8xf32>, vector<8x8xf32>, vector<8x8xf32>, vector<8x8xf32> -> vector<8x32xf32>
    %109 = arith.mulf %69, %106 : vector<8x32xf32>
    %110 = arith.truncf %109 : vector<8x32xf32> to vector<8x32xbf16>
    %cst_41 = arith.constant dense<0.000000e+00> : vector<8x4xf32>
    %111 = tpu.matmul %110, %5, %cst_41 {dimension_numbers = #tpu.dot_dimension_numbers<[1], [0], [0], [1], [0, 0, 1, 1], [], []>} : vector<8x32xbf16>, vector<32x4xbf16>, vector<8x4xf32> -> vector<8x4xf32>
    %112 = arith.truncf %111 : vector<8x4xf32> to vector<8x4xbf16>
    %cst_42 = arith.constant dense<0.000000e+00> : vector<8x32xf32>
    %113 = tpu.matmul %112, %6, %cst_42 {dimension_numbers = #tpu.dot_dimension_numbers<[1], [0], [0], [1], [0, 0, 1, 1], [], []>} : vector<8x4xbf16>, vector<4x32xbf16>, vector<8x32xf32> -> vector<8x32xf32>
    %114 = arith.mulf %113, %108 : vector<8x32xf32>
    %115 = arith.addf %104, %114 : vector<8x32xf32>
    %116 = arith.mulf %115, %66 : vector<8x32xf32>
    %117 = arith.truncf %116 : vector<8x32xf32> to vector<8x32xbf16>
    %cst_43 = arith.constant dense<0.000000e+00> : vector<8x32xf32>
    %118 = tpu.matmul %117, %3, %cst_43 {dimension_numbers = #tpu.dot_dimension_numbers<[1], [0], [0], [1], [0, 0, 1, 1], [], []>} : vector<8x32xbf16>, vector<32x32xbf16>, vector<8x32xf32> -> vector<8x32xf32>
    %119 = vector.broadcast %4 : vector<1x32xf32> to vector<8x32xf32>
    %120 = arith.addf %118, %119 : vector<8x32xf32>
    %c0_44 = arith.constant 0 : index
    %c0_45 = arith.constant 0 : index
    %121 = vector.load %arg12[%c0_44, %c0_45] : memref<8x32xf32, #tpu.memory_space<vmem>>, vector<8x32xf32>
    tpu.vector_store %arg12[%c0_44, %c0_45], %120 {strides = array<i32>} : memref<8x32xf32, #tpu.memory_space<vmem>>, vector<8x32xf32>,
    return
  }
  func.func @transform_0(%arg0: i32) -> (i32, i32) {
    %c0_i32 = arith.constant 0 : i32
    %c0_i32_0 = arith.constant 0 : i32
    return %arg0, %c0_i32 : i32, i32
  }
  func.func @transform_1(%arg0: i32) -> (i32, i32) {
    %c0_i32 = arith.constant 0 : i32
    %c0_i32_0 = arith.constant 0 : i32
    %c0_i32_1 = arith.constant 0 : i32
    return %c0_i32, %c0_i32_0 : i32, i32
  }
  func.func @transform_2(%arg0: i32) -> (i32, i32) {
    %c0_i32 = arith.constant 0 : i32
    %c0_i32_0 = arith.constant 0 : i32
    %c0_i32_1 = arith.constant 0 : i32
    return %c0_i32, %c0_i32_0 : i32, i32
  }
  func.func @transform_3(%arg0: i32) -> (i32, i32) {
    %c0_i32 = arith.constant 0 : i32
    %c0_i32_0 = arith.constant 0 : i32
    %c0_i32_1 = arith.constant 0 : i32
    return %c0_i32, %c0_i32_0 : i32, i32
  }
  func.func @transform_4(%arg0: i32) -> (i32, i32) {
    %c0_i32 = arith.constant 0 : i32
    %c0_i32_0 = arith.constant 0 : i32
    %c0_i32_1 = arith.constant 0 : i32
    return %c0_i32, %c0_i32_0 : i32, i32
  }
  func.func @transform_5(%arg0: i32) -> (i32, i32) {
    %c0_i32 = arith.constant 0 : i32
    %c0_i32_0 = arith.constant 0 : i32
    %c0_i32_1 = arith.constant 0 : i32
    return %c0_i32, %c0_i32_0 : i32, i32
  }
  func.func @transform_6(%arg0: i32) -> (i32, i32) {
    %c0_i32 = arith.constant 0 : i32
    %c0_i32_0 = arith.constant 0 : i32
    %c0_i32_1 = arith.constant 0 : i32
    return %c0_i32, %c0_i32_0 : i32, i32
  }
  func.func @transform_7(%arg0: i32) -> (i32, i32) {
    %c0_i32 = arith.constant 0 : i32
    %c0_i32_0 = arith.constant 0 : i32
    %c0_i32_1 = arith.constant 0 : i32
    return %c0_i32, %c0_i32_0 : i32, i32
  }
  func.func @transform_8(%arg0: i32) -> (i32, i32) {
    %c0_i32 = arith.constant 0 : i32
    %c0_i32_0 = arith.constant 0 : i32
    %c0_i32_1 = arith.constant 0 : i32
    return %c0_i32, %c0_i32_0 : i32, i32
  }
  func.func @transform_9(%arg0: i32) -> (i32, i32) {
    %c0_i32 = arith.constant 0 : i32
    %c0_i32_0 = arith.constant 0 : i32
    %c0_i32_1 = arith.constant 0 : i32
    return %c0_i32, %c0_i32_0 : i32, i32
  }
  func.func @transform_10(%arg0: i32) -> (i32, i32) {
    %c0_i32 = arith.constant 0 : i32
    %c0_i32_0 = arith.constant 0 : i32
    %c0_i32_1 = arith.constant 0 : i32
    return %c0_i32, %c0_i32_0 : i32, i32
  }
  func.func @transform_11(%arg0: i32) -> (i32, i32) {
    %c0_i32 = arith.constant 0 : i32
    %c0_i32_0 = arith.constant 0 : i32
    return %arg0, %c0_i32 : i32, i32
  }
}

</mosaic_0001>

<llo_original>
// kernel: tpu_custom_call.1
$region0: #{tpu_custom_call.1}
  #allocation0 [shape = 'u32[]', space=smem, size = 0x4, offset = 0x4, fixed_abs, tag = 'smem constant byte address 0x4 - core index']
  #allocation1 [shape = 'u32[144,128]{1,0:T(1,128)}', space=vmem, size = 0x12000, scoped, tag = 'internal scratch']
  %s0 = inlined_call_operand.vmem [shape: bf16[16,32], index: 0, kind: input, shape index: {}]
  %s1 = inlined_call_operand.vmem [shape: bf16[32,96], index: 1, kind: input, shape index: {}]
  %s2 = inlined_call_operand.vmem [shape: f32[1,96], index: 2, kind: input, shape index: {}]
  %s3 = inlined_call_operand.vmem [shape: bf16[32,32], index: 3, kind: input, shape index: {}]
  %s4 = inlined_call_operand.vmem [shape: f32[1,32], index: 4, kind: input, shape index: {}]
  %s5 = inlined_call_operand.vmem [shape: bf16[32,4], index: 5, kind: input, shape index: {}]
  %s6 = inlined_call_operand.vmem [shape: bf16[4,32], index: 6, kind: input, shape index: {}]
  %s7 = inlined_call_operand.vmem [shape: bf16[64,8], index: 7, kind: input, shape index: {}]
  %s8 = inlined_call_operand.vmem [shape: bf16[8,64], index: 8, kind: input, shape index: {}]
  %s9 = inlined_call_operand.vmem [shape: bf16[8,1], index: 9, kind: input, shape index: {}]
  %s10 = inlined_call_operand.vmem [shape: bf16[1,8], index: 10, kind: input, shape index: {}]
  %s11 = inlined_call_operand.hbm [shape: f32[16,32], index: 11, kind: output, shape index: {}]
  %s12 = sld [smem:[#allocation0]]
  $region77: #{tpu_custom_call.1} parent=0
    _
  %s14 = ssub.s32 1, %s12
  %s15 = scalar_select 0, %s14, %s12
  $region1: #{tpu_custom_call.1} parent=0
    #allocation2 [shape = 'u8[8192]{0}', space=vmem, size = 0x2000, scoped, tag = 'output window, operand 0']
    #allocation3 [shape = 's32[2]{0}', space=sflag, size = 0x8, scoped, tag = 'scoped memory for tpu_custom_call.1']
    %16 = vsyncpa [#allocation3], 0
    %s17 = scalar_lea.sflag [#allocation3], 1
    %18 = vsyncpa %s17, 0
    loop: start=0, step=1, limit=4
    $region2: #{tpu_custom_call.1} parent=1 // loop_pre_header
      _
    $region3: #{tpu_custom_call.1} parent=1 // loop_header
      %s20 = sphi 0, %s24
      %p21 = scmp.ge.s32.totalorder %s20, 4
      %s30 = sphi 0, %s32
      %s33 = sphi 0, %s30
      %s34 = sphi 0, %s33
      %s50 = sphi 0, %s34
      %s54 = sphi 0, %s54
      %s56 = sphi 0, %s54
      %s57 = sphi 0, %s56
      %s71 = sphi 0, %s57
      %s75 = sphi 0, %s75
      %s77 = sphi 0, %s75
      %s78 = sphi 0, %s77
      %s92 = sphi 0, %s78
      %s96 = sphi 0, %s96
      %s98 = sphi 0, %s96
      %s99 = sphi 0, %s98
      %s113 = sphi 0, %s99
      %s117 = sphi 0, %s117
      %s119 = sphi 0, %s117
      %s120 = sphi 0, %s119
      %s134 = sphi 0, %s120
      %s138 = sphi 0, %s138
      %s140 = sphi 0, %s138
      %s141 = sphi 0, %s140
      %s155 = sphi 0, %s141
      %s159 = sphi 0, %s159
      %s161 = sphi 0, %s159
      %s162 = sphi 0, %s161
      %s176 = sphi 0, %s162
      %s180 = sphi 0, %s180
      %s182 = sphi 0, %s180
      %s183 = sphi 0, %s182
      %s197 = sphi 0, %s183
      %s201 = sphi 0, %s201
      %s203 = sphi 0, %s201
      %s204 = sphi 0, %s203
      %s218 = sphi 0, %s204
      %s222 = sphi 0, %s222
      %s224 = sphi 0, %s222
      %s225 = sphi 0, %s224
      %s239 = sphi 0, %s225
      %s243 = sphi 0, %s243
      %s245 = sphi 0, %s243
      %s246 = sphi 0, %s245
      %s260 = sphi 0, %s246
      %s266 = sphi 0, %s268
      %s269 = sphi 0, %s266
      %s270 = sphi 0, %s269
      %s286 = sphi 0, %s270
    $region4: #{tpu_custom_call.1} parent=1 // loop_header_branch
      %23 = sbr.rel (%p21) target = $region8
    $region5: #{tpu_custom_call.1} parent=1 // loop_body
      %s25 = ssub.s32 %s20, 1
      %s26 = ssub.s32 %s20, 2
      %s27 = sadd.s32 %s20, 1
      %s28 = ssub.s32 %s20, %s27
      %p29 = scmp.eq.s32.totalorder %s28, 0
      %s31 = sadd.s32 %s30, 1
      %s32 = scalar_select %p29, %s30, %s31
      %p35 = pneg %p29
      %p36 = scmp.eq.s32.totalorder %s20, 1
      %p37 = por %p35, %p36
      %p38 = scmp.ne.s32.totalorder %s30, %s33
      %p39 = scmp.eq.s32.totalorder %s20, 0
      %p40 = por %p38, %p39
      %p41 = scmp.ne.s32.totalorder %s30, %s33
      %p42 = scmp.eq.s32.totalorder %s25, 1
      %p43 = por %p41, %p42
      %p44 = scmp.ne.s32.totalorder %s33, %s34
      %p45 = scmp.eq.s32.totalorder %s25, 0
      %p46 = por %p44, %p45
      %p47 = scmp.ne.s32.totalorder %s33, %s34
      %p48 = scmp.eq.s32.totalorder %s26, 1
      %p49 = por %p47, %p48
      %p51 = scmp.ne.s32.totalorder %s34, %s50
      %p52 = scmp.eq.s32.totalorder %s26, 0
      %p53 = por %p51, %p52
      %s55 = sadd.s32 %s54, 1
      %p58 = scmp.eq.s32.totalorder %s20, 1
      %p59 = scmp.ne.s32.totalorder %s54, %s56
      %p60 = scmp.eq.s32.totalorder %s20, 0
      %p61 = por %p59, %p60
      %p62 = scmp.ne.s32.totalorder %s54, %s56
      %p63 = scmp.eq.s32.totalorder %s25, 1
      %p64 = por %p62, %p63
      %p65 = scmp.ne.s32.totalorder %s56, %s57
      %p66 = scmp.eq.s32.totalorder %s25, 0
      %p67 = por %p65, %p66
      %p68 = scmp.ne.s32.totalorder %s56, %s57
      %p69 = scmp.eq.s32.totalorder %s26, 1
      %p70 = por %p68, %p69
      %p72 = scmp.ne.s32.totalorder %s57, %s71
      %p73 = scmp.eq.s32.totalorder %s26, 0
      %p74 = por %p72, %p73
      %s76 = sadd.s32 %s75, 1
      %p79 = scmp.eq.s32.totalorder %s20, 1
      %p80 = scmp.ne.s32.totalorder %s75, %s77
      %p81 = scmp.eq.s32.totalorder %s20, 0
      %p82 = por %p80, %p81
      %p83 = scmp.ne.s32.totalorder %s75, %s77
      %p84 = scmp.eq.s32.totalorder %s25, 1
      %p85 = por %p83, %p84
      %p86 = scmp.ne.s32.totalorder %s77, %s78
      %p87 = scmp.eq.s32.totalorder %s25, 0
      %p88 = por %p86, %p87
      %p89 = scmp.ne.s32.totalorder %s77, %s78
      %p90 = scmp.eq.s32.totalorder %s26, 1
      %p91 = por %p89, %p90
      %p93 = scmp.ne.s32.totalorder %s78, %s92
      %p94 = scmp.eq.s32.totalorder %s26, 0
      %p95 = por %p93, %p94
      %s97 = sadd.s32 %s96, 1
      %p100 = scmp.eq.s32.totalorder %s20, 1
      %p101 = scmp.ne.s32.totalorder %s96, %s98
      %p102 = scmp.eq.s32.totalorder %s20, 0
      %p103 = por %p101, %p102
      %p104 = scmp.ne.s32.totalorder %s96, %s98
      %p105 = scmp.eq.s32.totalorder %s25, 1
      %p106 = por %p104, %p105
      %p107 = scmp.ne.s32.totalorder %s98, %s99
      %p108 = scmp.eq.s32.totalorder %s25, 0
      %p109 = por %p107, %p108
      %p110 = scmp.ne.s32.totalorder %s98, %s99
      %p111 = scmp.eq.s32.totalorder %s26, 1
      %p112 = por %p110, %p111
      %p114 = scmp.ne.s32.totalorder %s99, %s113
      %p115 = scmp.eq.s32.totalorder %s26, 0
      %p116 = por %p114, %p115
      %s118 = sadd.s32 %s117, 1
      %p121 = scmp.eq.s32.totalorder %s20, 1
      %p122 = scmp.ne.s32.totalorder %s117, %s119
      %p123 = scmp.eq.s32.totalorder %s20, 0
      %p124 = por %p122, %p123
      %p125 = scmp.ne.s32.totalorder %s117, %s119
      %p126 = scmp.eq.s32.totalorder %s25, 1
      %p127 = por %p125, %p126
      %p128 = scmp.ne.s32.totalorder %s119, %s120
      %p129 = scmp.eq.s32.totalorder %s25, 0
      %p130 = por %p128, %p129
      %p131 = scmp.ne.s32.totalorder %s119, %s120
      %p132 = scmp.eq.s32.totalorder %s26, 1
      %p133 = por %p131, %p132
      %p135 = scmp.ne.s32.totalorder %s120, %s134
      %p136 = scmp.eq.s32.totalorder %s26, 0
      %p137 = por %p135, %p136
      %s139 = sadd.s32 %s138, 1
      %p142 = scmp.eq.s32.totalorder %s20, 1
      %p143 = scmp.ne.s32.totalorder %s138, %s140
      %p144 = scmp.eq.s32.totalorder %s20, 0
      %p145 = por %p143, %p144
      %p146 = scmp.ne.s32.totalorder %s138, %s140
      %p147 = scmp.eq.s32.totalorder %s25, 1
      %p148 = por %p146, %p147
      %p149 = scmp.ne.s32.totalorder %s140, %s141
      %p150 = scmp.eq.s32.totalorder %s25, 0
      %p151 = por %p149, %p150
      %p152 = scmp.ne.s32.totalorder %s140, %s141
      %p153 = scmp.eq.s32.totalorder %s26, 1
      %p154 = por %p152, %p153
      %p156 = scmp.ne.s32.totalorder %s141, %s155
      %p157 = scmp.eq.s32.totalorder %s26, 0
      %p158 = por %p156, %p157
      %s160 = sadd.s32 %s159, 1
      %p163 = scmp.eq.s32.totalorder %s20, 1
      %p164 = scmp.ne.s32.totalorder %s159, %s161
      %p165 = scmp.eq.s32.totalorder %s20, 0
      %p166 = por %p164, %p165
      %p167 = scmp.ne.s32.totalorder %s159, %s161
      %p168 = scmp.eq.s32.totalorder %s25, 1
      %p169 = por %p167, %p168
      %p170 = scmp.ne.s32.totalorder %s161, %s162
      %p171 = scmp.eq.s32.totalorder %s25, 0
      %p172 = por %p170, %p171
      %p173 = scmp.ne.s32.totalorder %s161, %s162
      %p174 = scmp.eq.s32.totalorder %s26, 1
      %p175 = por %p173, %p174
      %p177 = scmp.ne.s32.totalorder %s162, %s176
      %p178 = scmp.eq.s32.totalorder %s26, 0
      %p179 = por %p177, %p178
      %s181 = sadd.s32 %s180, 1
      %p184 = scmp.eq.s32.totalorder %s20, 1
      %p185 = scmp.ne.s32.totalorder %s180, %s182
      %p186 = scmp.eq.s32.totalorder %s20, 0
      %p187 = por %p185, %p186
      %p188 = scmp.ne.s32.totalorder %s180, %s182
      %p189 = scmp.eq.s32.totalorder %s25, 1
      %p190 = por %p188, %p189
      %p191 = scmp.ne.s32.totalorder %s182, %s183
      %p192 = scmp.eq.s32.totalorder %s25, 0
      %p193 = por %p191, %p192
      %p194 = scmp.ne.s32.totalorder %s182, %s183
      %p195 = scmp.eq.s32.totalorder %s26, 1
      %p196 = por %p194, %p195
      %p198 = scmp.ne.s32.totalorder %s183, %s197
      %p199 = scmp.eq.s32.totalorder %s26, 0
      %p200 = por %p198, %p199
      %s202 = sadd.s32 %s201, 1
      %p205 = scmp.eq.s32.totalorder %s20, 1
      %p206 = scmp.ne.s32.totalorder %s201, %s203
      %p207 = scmp.eq.s32.totalorder %s20, 0
      %p208 = por %p206, %p207
      %p209 = scmp.ne.s32.totalorder %s201, %s203
      %p210 = scmp.eq.s32.totalorder %s25, 1
      %p211 = por %p209, %p210
      %p212 = scmp.ne.s32.totalorder %s203, %s204
      %p213 = scmp.eq.s32.totalorder %s25, 0
      %p214 = por %p212, %p213
      %p215 = scmp.ne.s32.totalorder %s203, %s204
      %p216 = scmp.eq.s32.totalorder %s26, 1
      %p217 = por %p215, %p216
      %p219 = scmp.ne.s32.totalorder %s204, %s218
      %p220 = scmp.eq.s32.totalorder %s26, 0
      %p221 = por %p219, %p220
      %s223 = sadd.s32 %s222, 1
      %p226 = scmp.eq.s32.totalorder %s20, 1
      %p227 = scmp.ne.s32.totalorder %s222, %s224
      %p228 = scmp.eq.s32.totalorder %s20, 0
      %p229 = por %p227, %p228
      %p230 = scmp.ne.s32.totalorder %s222, %s224
      %p231 = scmp.eq.s32.totalorder %s25, 1
      %p232 = por %p230, %p231
      %p233 = scmp.ne.s32.totalorder %s224, %s225
      %p234 = scmp.eq.s32.totalorder %s25, 0
      %p235 = por %p233, %p234
      %p236 = scmp.ne.s32.totalorder %s224, %s225
      %p237 = scmp.eq.s32.totalorder %s26, 1
      %p238 = por %p236, %p237
      %p240 = scmp.ne.s32.totalorder %s225, %s239
      %p241 = scmp.eq.s32.totalorder %s26, 0
      %p242 = por %p240, %p241
      %s244 = sadd.s32 %s243, 1
      %p247 = scmp.eq.s32.totalorder %s20, 1
      %p248 = scmp.ne.s32.totalorder %s243, %s245
      %p249 = scmp.eq.s32.totalorder %s20, 0
      %p250 = por %p248, %p249
      %p251 = scmp.ne.s32.totalorder %s243, %s245
      %p252 = scmp.eq.s32.totalorder %s25, 1
      %p253 = por %p251, %p252
      %p254 = scmp.ne.s32.totalorder %s245, %s246
      %p255 = scmp.eq.s32.totalorder %s25, 0
      %p256 = por %p254, %p255
      %p257 = scmp.ne.s32.totalorder %s245, %s246
      %p258 = scmp.eq.s32.totalorder %s26, 1
      %p259 = por %p257, %p258
      %p261 = scmp.ne.s32.totalorder %s246, %s260
      %p262 = scmp.eq.s32.totalorder %s26, 0
      %p263 = por %p261, %p262
      %s264 = ssub.s32 %s20, %s27
      %p265 = scmp.eq.s32.totalorder %s264, 0
      %s267 = sadd.s32 %s266, 1
      %s268 = scalar_select %p265, %s266, %s267
      %p271 = pneg %p265
      %p272 = scmp.eq.s32.totalorder %s20, 1
      %p273 = por %p271, %p272
      %p274 = scmp.ne.s32.totalorder %s266, %s269
      %p275 = scmp.eq.s32.totalorder %s20, 0
      %p276 = por %p274, %p275
      %p277 = scmp.ne.s32.totalorder %s266, %s269
      %p278 = scmp.eq.s32.totalorder %s25, 1
      %p279 = por %p277, %p278
      %p280 = scmp.ne.s32.totalorder %s269, %s270
      %p281 = scmp.eq.s32.totalorder %s25, 0
      %p282 = por %p280, %p281
      %p283 = scmp.ne.s32.totalorder %s269, %s270
      %p284 = scmp.eq.s32.totalorder %s26, 1
      %p285 = por %p283, %p284
      %p287 = scmp.ne.s32.totalorder %s270, %s286
      %p288 = scmp.eq.s32.totalorder %s26, 0
      %p289 = por %p287, %p288
      %p290 = scmp.le.s32.totalorder 1, %s20
      %p291 = scmp.lt.s32.totalorder %s20, 3
      %p292 = pnand %p290, %p291
      %p293 = pneg %p292
      // Predicated region
      $region9: #{tpu_custom_call.1} parent=5 // pred_check
        _
      $region10: #{tpu_custom_call.1} parent=5 // pred_check_branch
        %295 = sbr.rel (%p292) target = $region12
      $region11: #{tpu_custom_call.1} parent=5 // pred_region
        %s296 = ssub.s32 %s20, 1
        // Predicated region
        $region13: #{tpu_custom_call.1} parent=11 // pred_check
          %p297 = pneg %p67
        $region14: #{tpu_custom_call.1} parent=11 // pred_check_branch
          %299 = sbr.rel (%p297) target = $region16
        $region15: #{tpu_custom_call.1} parent=11 // pred_region
          _
        $region16: #{tpu_custom_call.1} parent=11 // pred_fallthru
          _
        // Predicated region
        $region17: #{tpu_custom_call.1} parent=11 // pred_check
          %p300 = pneg %p88
        $region18: #{tpu_custom_call.1} parent=11 // pred_check_branch
          %302 = sbr.rel (%p300) target = $region20
        $region19: #{tpu_custom_call.1} parent=11 // pred_region
          _
        $region20: #{tpu_custom_call.1} parent=11 // pred_fallthru
          _
        // Predicated region
        $region21: #{tpu_custom_call.1} parent=11 // pred_check
          %p303 = pneg %p109
        $region22: #{tpu_custom_call.1} parent=11 // pred_check_branch
          %305 = sbr.rel (%p303) target = $region24
        $region23: #{tpu_custom_call.1} parent=11 // pred_region
          _
        $region24: #{tpu_custom_call.1} parent=11 // pred_fallthru
          _
        // Predicated region
        $region25: #{tpu_custom_call.1} parent=11 // pred_check
          %p306 = pneg %p130
        $region26: #{tpu_custom_call.1} parent=11 // pred_check_branch
          %308 = sbr.rel (%p306) target = $region28
        $region27: #{tpu_custom_call.1} parent=11 // pred_region
          _
        $region28: #{tpu_custom_call.1} parent=11 // pred_fallthru
          _
        // Predicated region
        $region29: #{tpu_custom_call.1} parent=11 // pred_check
          %p309 = pneg %p151
        $region30: #{tpu_custom_call.1} parent=11 // pred_check_branch
          %311 = sbr.rel (%p309) target = $region32
        $region31: #{tpu_custom_call.1} parent=11 // pred_region
          _
        $region32: #{tpu_custom_call.1} parent=11 // pred_fallthru
          _
        // Predicated region
        $region33: #{tpu_custom_call.1} parent=11 // pred_check
          %p312 = pneg %p172
        $region34: #{tpu_custom_call.1} parent=11 // pred_check_branch
          %314 = sbr.rel (%p312) target = $region36
        $region35: #{tpu_custom_call.1} parent=11 // pred_region
          _
        $region36: #{tpu_custom_call.1} parent=11 // pred_fallthru
          _
        // Predicated region
        $region37: #{tpu_custom_call.1} parent=11 // pred_check
          %p315 = pneg %p193
        $region38: #{tpu_custom_call.1} parent=11 // pred_check_branch
          %317 = sbr.rel (%p315) target = $region40
        $region39: #{tpu_custom_call.1} parent=11 // pred_region
          _
        $region40: #{tpu_custom_call.1} parent=11 // pred_fallthru
          _
        // Predicated region
        $region41: #{tpu_custom_call.1} parent=11 // pred_check
          %p318 = pneg %p214
        $region42: #{tpu_custom_call.1} parent=11 // pred_check_branch
          %320 = sbr.rel (%p318) target = $region44
        $region43: #{tpu_custom_call.1} parent=11 // pred_region
          _
        $region44: #{tpu_custom_call.1} parent=11 // pred_fallthru
          _
        // Predicated region
        $region45: #{tpu_custom_call.1} parent=11 // pred_check
          %p321 = pneg %p235
        $region46: #{tpu_custom_call.1} parent=11 // pred_check_branch
          %323 = sbr.rel (%p321) target = $region48
        $region47: #{tpu_custom_call.1} parent=11 // pred_region
          _
        $region48: #{tpu_custom_call.1} parent=11 // pred_fallthru
          _
        // Predicated region
        $region49: #{tpu_custom_call.1} parent=11 // pred_check
          %p324 = pneg %p256
        $region50: #{tpu_custom_call.1} parent=11 // pred_check_branch
          %326 = sbr.rel (%p324) target = $region52
        $region51: #{tpu_custom_call.1} parent=11 // pred_region
          _
        $region52: #{tpu_custom_call.1} parent=11 // pred_fallthru
          _
      $region12: #{tpu_custom_call.1} parent=5 // pred_fallthru
        _
      %p327 = scmp.lt.s32.totalorder %s20, 2
      // Predicated region
      $region53: #{tpu_custom_call.1} parent=5 // pred_check
        %p328 = pneg %p327
      $region54: #{tpu_custom_call.1} parent=5 // pred_check_branch
        %330 = sbr.rel (%p328) target = $region56
      $region55: #{tpu_custom_call.1} parent=5 // pred_region
        // Predicated region
        $region57: #{tpu_custom_call.1} parent=55 // pred_check
          %p331 = pneg %p40
        $region58: #{tpu_custom_call.1} parent=55 // pred_check_branch
          %333 = sbr.rel (%p331) target = $region60
        $region59: #{tpu_custom_call.1} parent=55 // pred_region
          %p334 = scmp.lt.s32.totalorder %s20, 1
          %s335 = scalar_select %p334, %s20, 1
          %s336 = smul.addr %s335, 4
          %s337 = scalar_lea.vmem %s0, %s336
        $region60: #{tpu_custom_call.1} parent=55 // pred_fallthru
          _
      $region56: #{tpu_custom_call.1} parent=5 // pred_fallthru
        _
      %p338 = scmp.le.s32.totalorder 1, %s20
      %p339 = scmp.lt.s32.totalorder %s20, 3
      %p340 = pnand %p338, %p339
      %p341 = pneg %p340
      // Predicated region
      $region61: #{tpu_custom_call.1} parent=5 // pred_check
        _
      $region62: #{tpu_custom_call.1} parent=5 // pred_check_branch
        %343 = sbr.rel (%p340) target = $region64
      $region63: #{tpu_custom_call.1} parent=5 // pred_region
        %s344 = ssub.s32 %s20, 1
        %p345 = scmp.lt.s32.totalorder %s25, 1
        %s346 = scalar_select %p345, %s25, 1
        %s347 = smul.addr %s346, 4
        %s348 = scalar_lea.vmem %s0, %s347
        %p349 = pneg %p46
        %p350 = pneg %p43
        %p351 = pneg %p67
        %p352 = pneg %p64
        %p353 = pneg %p88
        %p354 = pneg %p85
        %p355 = pneg %p109
        %p356 = pneg %p106
        %p357 = pneg %p130
        %p358 = pneg %p127
        %p359 = pneg %p151
        %p360 = pneg %p148
        %p361 = pneg %p172
        %p362 = pneg %p169
        %p363 = pneg %p193
        %p364 = pneg %p190
        %p365 = pneg %p214
        %p366 = pneg %p211
        %p367 = pneg %p235
        %p368 = pneg %p232
        %p369 = pneg %p256
        %p370 = pneg %p253
        %p371 = pneg %p282
        %p372 = pneg %p279
        %s373 = sand.u32 %s269, 1
        %s374 = scalar_lea.sflag [#allocation3], %s373
        %s375 = sand.u32 %s269, 1
        %s376 = smul.addr %s375, 8
        %s377 = scalar_lea.vmem [#allocation2], %s376
        %p378 = scmp.lt.s32.totalorder %s25, 1
        %s379 = scalar_select %p378, %s25, 1
        %s380 = smul.addr %s379, 4
        %s381 = scalar_lea.vmem %s0, %s380
        %v383 = vld [vmem:[%s381] sm:$0xf]
        %v384 = vld [vmem:[%s1] sm:$0xf]
        %v385 = vld [vmem:[%s1 + $0x4] sm:$0xf]
        %v386 = vld [vmem:[%s1 + $0x8] sm:$0xf]
        %v387 = vld [vmem:[%s1 + $0xc] sm:$0xf]
        %v388 = vld [vmem:[%s2] sm:$0x1]
        %v389 = vld [vmem:[%s3] sm:$0xf]
        %v390 = vld [vmem:[%s3 + $0x4] sm:$0xf]
        %v391 = vld [vmem:[%s3 + $0x8] sm:$0xf]
        %v392 = vld [vmem:[%s3 + $0xc] sm:$0xf]
        %v393 = vld [vmem:[%s4] sm:$0x1]
        %v394 = vld [vmem:[%s5] sm:$0xf]
        %v395 = vld [vmem:[%s5 + $0x4] sm:$0xf]
        %v396 = vld [vmem:[%s5 + $0x8] sm:$0xf]
        %v397 = vld [vmem:[%s5 + $0xc] sm:$0xf]
        %v398 = vld [vmem:[%s6] sm:$0x3]
        %v399 = vld [vmem:[%s7] sm:$0xf]
        %v400 = vld [vmem:[%s7 + $0x4] sm:$0xf]
        %v401 = vld [vmem:[%s7 + $0x8] sm:$0xf]
        %v402 = vld [vmem:[%s7 + $0xc] sm:$0xf]
        %v403 = vld [vmem:[%s7 + $0x10] sm:$0xf]
        %v404 = vld [vmem:[%s7 + $0x14] sm:$0xf]
        %v405 = vld [vmem:[%s7 + $0x18] sm:$0xf]
        %v406 = vld [vmem:[%s7 + $0x1c] sm:$0xf]
        %v407 = vld [vmem:[%s8] sm:$0xf]
        %v408 = vld [vmem:[%s9] sm:$0xf]
        %v409 = vld [vmem:[%s10] sm:$0x1]
        %v411 = vlaneseq
        %v412 = vshrl.u32 %v411, 7
        %v413 = vsub.s32 0, %v412
        %v414 = vrot.slane %v388, %v413
        %v420 = vunpack.c.l.b16 %v384
        %v421 = vunpack.c.l.b16 %v385
        %v422 = vunpack.c.l.b16 %v386
        %v423 = vunpack.c.l.b16 %v387
        %v424 = vpack.c.b16 %v421, %v420
        %v425 = vpack.c.b16 %v423, %v422
        %vm428 = vcmask 261120
        %v430 = vsel %vm428, %v383, 0
        %432 = vmatprep.subr.bf16.mxu0 0
        %433 = vmatpush1.bf16.msra.mxu0 %v424
        %434 = vmatprep.subr.bf16.mxu0 0
        %435 = vmatpush1.bf16.msra.mxu0 %v425
        %436 = vmatprep.subr.bf16.mxu0 0
        %437 = vmatpush1.bf16.msra.mxu0 0
        %438 = vmatprep.subr.bf16.mxu0 0
        %439 = vmatpush1.bf16.msra.mxu0 0
        %440 = vmatprep.subr.bf16.mxu0 0
        %441 = vmatpush1.bf16.msra.mxu0 0
        %442 = vmatprep.subr.bf16.mxu0 0
        %443 = vmatpush1.bf16.msra.mxu0 0
        %444 = vmatprep.subr.bf16.mxu0 0
        %445 = vmatpush1.bf16.msra.mxu0 0
        %446 = vmatprep.subr.bf16.mxu0 0
        %447 = vmatpush1.bf16.msra.mxu0 0
        %448 = vmatprep.subr.bf16.mxu0 0
        %449 = vmatpush1.bf16.msra.mxu0 0
        %450 = vmatprep.subr.bf16.mxu0 0
        %451 = vmatpush1.bf16.msra.mxu0 0
        %452 = vmatprep.subr.bf16.mxu0 0
        %453 = vmatpush1.bf16.msra.mxu0 0
        %454 = vmatprep.subr.bf16.mxu0 0
        %455 = vmatpush1.bf16.msra.mxu0 0
        %456 = vmatprep.subr.bf16.mxu0 0
        %457 = vmatpush1.bf16.msra.mxu0 0
        %458 = vmatprep.subr.bf16.mxu0 0
        %459 = vmatpush1.bf16.msra.mxu0 0
        %460 = vmatprep.subr.bf16.mxu0 0
        %461 = vmatpush1.bf16.msra.mxu0 0
        %462 = vmatprep.subr.bf16.mxu0 0
        %463 = vmatpush1.bf16.msra.mxu0 0
        %464 = vmatprep.mubr.bf16.mxu0 0
        %465 = vmatmul.mubr.bf16.gmra.mrb[0].mxu0 %v430
        %v466 = vpop.f32.mrb[0].mxu0
        %v467 = vadd.f32 %v414, %v466
        %v468 = vpop.f32.mrb[0].mxu0
        %v469 = vpop.f32.mrb[0].mxu0
        %v470 = vpop.f32.mrb[0].mxu0
        %471 = vdwg.mxu0
        %v472 = vxor.u32 %v467, 2147483648
        %v473 = vmul.f32 %v472, 1.442695
        %v474 = vpow.pop %v473
        %v475 = vadd.f32 %v474, 1.0
        %v476 = vrcp.pop %v475
        %v477 = vmul.f32 1.0, %v476
        %v478 = vpack.c.bf16 %v477, %v477
        %vm479 = vcmask 64512
        %v481 = vsel %vm479, %v409, 0
        %vm483 = vcmask 1043456
        %v485 = vsel %vm483, %v478, 0
        %487 = vmatprep.subr.bf16.mxu0 0
        %488 = vmatpush1.bf16.msra.mxu0 %v485
        %489 = vmatprep.subr.bf16.mxu0 0
        %490 = vmatpush1.bf16.msra.mxu0 0
        %491 = vmatprep.subr.bf16.mxu0 0
        %492 = vmatpush1.bf16.msra.mxu0 0
        %493 = vmatprep.subr.bf16.mxu0 0
        %494 = vmatpush1.bf16.msra.mxu0 0
        %495 = vmatprep.subr.bf16.mxu0 0
        %496 = vmatpush1.bf16.msra.mxu0 0
        %497 = vmatprep.subr.bf16.mxu0 0
        %498 = vmatpush1.bf16.msra.mxu0 0
        %499 = vmatprep.subr.bf16.mxu0 0
        %500 = vmatpush1.bf16.msra.mxu0 0
        %501 = vmatprep.subr.bf16.mxu0 0
        %502 = vmatpush1.bf16.msra.mxu0 0
        %503 = vmatprep.subr.bf16.mxu0 0
        %504 = vmatpush1.bf16.msra.mxu0 0
        %505 = vmatprep.subr.bf16.mxu0 0
        %506 = vmatpush1.bf16.msra.mxu0 0
        %507 = vmatprep.subr.bf16.mxu0 0
        %508 = vmatpush1.bf16.msra.mxu0 0
        %509 = vmatprep.subr.bf16.mxu0 0
        %510 = vmatpush1.bf16.msra.mxu0 0
        %511 = vmatprep.subr.bf16.mxu0 0
        %512 = vmatpush1.bf16.msra.mxu0 0
        %513 = vmatprep.subr.bf16.mxu0 0
        %514 = vmatpush1.bf16.msra.mxu0 0
        %515 = vmatprep.subr.bf16.mxu0 0
        %516 = vmatpush1.bf16.msra.mxu0 0
        %517 = vmatprep.subr.bf16.mxu0 0
        %518 = vmatpush1.bf16.msra.mxu0 0
        %519 = vmatprep.mubr.bf16.mxu0 0
        %520 = vmatmul.mubr.bf16.gmra.mrb[0].mxu0 %v481
        %v521 = vpop.f32.mrb[0].mxu0
        %v522 = vadd.f32 0.0, %v521
        %v523 = vpop.f32.mrb[0].mxu0
        %v524 = vpop.f32.mrb[0].mxu0
        %v525 = vpop.f32.mrb[0].mxu0
        %526 = vdwg.mxu0
        %v527 = vpack.c.bf16 %v522, %v522
        %vm528 = vcmask 7168
        %v530 = vsel %vm528, %v408, 0
        %vm532 = vcmask 1040384
        %v533 = vsel 0, 4294967295, 65535
        %v534 = vsel %vm532, %v533, 0
        %v536 = vand.u32 %v527, %v534
        %538 = vmatprep.subr.bf16.mxu0 0
        %539 = vmatpush1.bf16.msra.mxu0 %v536
        %540 = vmatprep.subr.bf16.mxu0 0
        %541 = vmatpush1.bf16.msra.mxu0 0
        %542 = vmatprep.subr.bf16.mxu0 0
        %543 = vmatpush1.bf16.msra.mxu0 0
        %544 = vmatprep.subr.bf16.mxu0 0
        %545 = vmatpush1.bf16.msra.mxu0 0
        %546 = vmatprep.subr.bf16.mxu0 0
        %547 = vmatpush1.bf16.msra.mxu0 0
        %548 = vmatprep.subr.bf16.mxu0 0
        %549 = vmatpush1.bf16.msra.mxu0 0
        %550 = vmatprep.subr.bf16.mxu0 0
        %551 = vmatpush1.bf16.msra.mxu0 0
        %552 = vmatprep.subr.bf16.mxu0 0
        %553 = vmatpush1.bf16.msra.mxu0 0
        %554 = vmatprep.subr.bf16.mxu0 0
        %555 = vmatpush1.bf16.msra.mxu0 0
        %556 = vmatprep.subr.bf16.mxu0 0
        %557 = vmatpush1.bf16.msra.mxu0 0
        %558 = vmatprep.subr.bf16.mxu0 0
        %559 = vmatpush1.bf16.msra.mxu0 0
        %560 = vmatprep.subr.bf16.mxu0 0
        %561 = vmatpush1.bf16.msra.mxu0 0
        %562 = vmatprep.subr.bf16.mxu0 0
        %563 = vmatpush1.bf16.msra.mxu0 0
        %564 = vmatprep.subr.bf16.mxu0 0
        %565 = vmatpush1.bf16.msra.mxu0 0
        %566 = vmatprep.subr.bf16.mxu0 0
        %567 = vmatpush1.bf16.msra.mxu0 0
        %568 = vmatprep.subr.bf16.mxu0 0
        %569 = vmatpush1.bf16.msra.mxu0 0
        %570 = vmatprep.mubr.bf16.mxu0 0
        %571 = vmatmul.mubr.bf16.gmra.mrb[0].mxu0 %v530
        %v572 = vpop.f32.mrb[0].mxu0
        %v573 = vadd.f32 0.0, %v572
        %v574 = vpop.f32.mrb[0].mxu0
        %v575 = vpop.f32.mrb[0].mxu0
        %v576 = vpop.f32.mrb[0].mxu0
        %577 = vdwg.mxu0
        %579 = vrot.lane.b32.xlu0 %v573, 96
        %v580 = vpop.permute.xlu0 %579
        %582 = vrot.lane.b32.xlu0 %v573, 32
        %v583 = vpop.permute.xlu0 %582
        %v585 = vsel %vm428, %v580, %v583
        %v586 = vmul.f32 %v477, %v585
        %v587 = vpack.c.bf16 %v586, %v586
        %v596 = vunpack.c.l.b16 %v399
        %v597 = vunpack.c.l.b16 %v400
        %v598 = vunpack.c.l.b16 %v401
        %v599 = vunpack.c.l.b16 %v402
        %v600 = vunpack.c.l.b16 %v403
        %v601 = vunpack.c.l.b16 %v404
        %v602 = vunpack.c.l.b16 %v405
        %v603 = vunpack.c.l.b16 %v406
        %v604 = vpack.c.b16 %v597, %v596
        %v605 = vpack.c.b16 %v599, %v598
        %v606 = vpack.c.b16 %v601, %v600
        %v607 = vpack.c.b16 %v603, %v602
        %vm612 = vcmask 523264
        %v614 = vsel %vm612, %v587, 0
        %616 = vmatprep.subr.bf16.mxu0 0
        %617 = vmatpush1.bf16.msra.mxu0 %v604
        %618 = vmatprep.subr.bf16.mxu0 0
        %619 = vmatpush1.bf16.msra.mxu0 %v605
        %620 = vmatprep.subr.bf16.mxu0 0
        %621 = vmatpush1.bf16.msra.mxu0 %v606
        %622 = vmatprep.subr.bf16.mxu0 0
        %623 = vmatpush1.bf16.msra.mxu0 %v607
        %624 = vmatprep.subr.bf16.mxu0 0
        %625 = vmatpush1.bf16.msra.mxu0 0
        %626 = vmatprep.subr.bf16.mxu0 0
        %627 = vmatpush1.bf16.msra.mxu0 0
        %628 = vmatprep.subr.bf16.mxu0 0
        %629 = vmatpush1.bf16.msra.mxu0 0
        %630 = vmatprep.subr.bf16.mxu0 0
        %631 = vmatpush1.bf16.msra.mxu0 0
        %632 = vmatprep.subr.bf16.mxu0 0
        %633 = vmatpush1.bf16.msra.mxu0 0
        %634 = vmatprep.subr.bf16.mxu0 0
        %635 = vmatpush1.bf16.msra.mxu0 0
        %636 = vmatprep.subr.bf16.mxu0 0
        %637 = vmatpush1.bf16.msra.mxu0 0
        %638 = vmatprep.subr.bf16.mxu0 0
        %639 = vmatpush1.bf16.msra.mxu0 0
        %640 = vmatprep.subr.bf16.mxu0 0
        %641 = vmatpush1.bf16.msra.mxu0 0
        %642 = vmatprep.subr.bf16.mxu0 0
        %643 = vmatpush1.bf16.msra.mxu0 0
        %644 = vmatprep.subr.bf16.mxu0 0
        %645 = vmatpush1.bf16.msra.mxu0 0
        %646 = vmatprep.subr.bf16.mxu0 0
        %647 = vmatpush1.bf16.msra.mxu0 0
        %648 = vmatprep.mubr.bf16.mxu0 0
        %649 = vmatmul.mubr.bf16.gmra.mrb[0].mxu0 %v614
        %v650 = vpop.f32.mrb[0].mxu0
        %v651 = vadd.f32 0.0, %v650
        %v652 = vpop.f32.mrb[0].mxu0
        %v653 = vpop.f32.mrb[0].mxu0
        %v654 = vpop.f32.mrb[0].mxu0
        %655 = vdwg.mxu0
        %v656 = vrcp.pop %v651
        %v657 = vpack.c.bf16 %v656, %v656
        %v659 = vsel %vm479, %v657, 0
        %v662 = vsel %vm483, %v407, 0
        %664 = vmatprep.subr.bf16.mxu0 0
        %665 = vmatpush1.bf16.msra.mxu0 %v662
        %666 = vmatprep.subr.bf16.mxu0 0
        %667 = vmatpush1.bf16.msra.mxu0 0
        %668 = vmatprep.subr.bf16.mxu0 0
        %669 = vmatpush1.bf16.msra.mxu0 0
        %670 = vmatprep.subr.bf16.mxu0 0
        %671 = vmatpush1.bf16.msra.mxu0 0
        %672 = vmatprep.subr.bf16.mxu0 0
        %673 = vmatpush1.bf16.msra.mxu0 0
        %674 = vmatprep.subr.bf16.mxu0 0
        %675 = vmatpush1.bf16.msra.mxu0 0
        %676 = vmatprep.subr.bf16.mxu0 0
        %677 = vmatpush1.bf16.msra.mxu0 0
        %678 = vmatprep.subr.bf16.mxu0 0
        %679 = vmatpush1.bf16.msra.mxu0 0
        %680 = vmatprep.subr.bf16.mxu0 0
        %681 = vmatpush1.bf16.msra.mxu0 0
        %682 = vmatprep.subr.bf16.mxu0 0
        %683 = vmatpush1.bf16.msra.mxu0 0
        %684 = vmatprep.subr.bf16.mxu0 0
        %685 = vmatpush1.bf16.msra.mxu0 0
        %686 = vmatprep.subr.bf16.mxu0 0
        %687 = vmatpush1.bf16.msra.mxu0 0
        %688 = vmatprep.subr.bf16.mxu0 0
        %689 = vmatpush1.bf16.msra.mxu0 0
        %690 = vmatprep.subr.bf16.mxu0 0
        %691 = vmatpush1.bf16.msra.mxu0 0
        %692 = vmatprep.subr.bf16.mxu0 0
        %693 = vmatpush1.bf16.msra.mxu0 0
        %694 = vmatprep.subr.bf16.mxu0 0
        %695 = vmatpush1.bf16.msra.mxu0 0
        %696 = vmatprep.mubr.bf16.mxu0 0
        %697 = vmatmul.mubr.bf16.gmra.mrb[0].mxu0 %v659
        %v698 = vpop.f32.mrb[0].mxu0
        %v699 = vadd.f32 0.0, %v698
        %v700 = vpop.f32.mrb[0].mxu0
        %v701 = vpop.f32.mrb[0].mxu0
        %v702 = vpop.f32.mrb[0].mxu0
        %703 = vdwg.mxu0
        %v704 = vmul.f32 %v477, %v699
        %v705 = vpack.c.bf16 %v704, %v704
        %v707 = vsel %vm483, %v705, 0
        %709 = vmatprep.subr.bf16.mxu0 0
        %710 = vmatpush1.bf16.msra.mxu0 %v707
        %711 = vmatprep.subr.bf16.mxu0 0
        %712 = vmatpush1.bf16.msra.mxu0 0
        %713 = vmatprep.subr.bf16.mxu0 0
        %714 = vmatpush1.bf16.msra.mxu0 0
        %715 = vmatprep.subr.bf16.mxu0 0
        %716 = vmatpush1.bf16.msra.mxu0 0
        %717 = vmatprep.subr.bf16.mxu0 0
        %718 = vmatpush1.bf16.msra.mxu0 0
        %719 = vmatprep.subr.bf16.mxu0 0
        %720 = vmatpush1.bf16.msra.mxu0 0
        %721 = vmatprep.subr.bf16.mxu0 0
        %722 = vmatpush1.bf16.msra.mxu0 0
        %723 = vmatprep.subr.bf16.mxu0 0
        %724 = vmatpush1.bf16.msra.mxu0 0
        %725 = vmatprep.subr.bf16.mxu0 0
        %726 = vmatpush1.bf16.msra.mxu0 0
        %727 = vmatprep.subr.bf16.mxu0 0
        %728 = vmatpush1.bf16.msra.mxu0 0
        %729 = vmatprep.subr.bf16.mxu0 0
        %730 = vmatpush1.bf16.msra.mxu0 0
        %731 = vmatprep.subr.bf16.mxu0 0
        %732 = vmatpush1.bf16.msra.mxu0 0
        %733 = vmatprep.subr.bf16.mxu0 0
        %734 = vmatpush1.bf16.msra.mxu0 0
        %735 = vmatprep.subr.bf16.mxu0 0
        %736 = vmatpush1.bf16.msra.mxu0 0
        %737 = vmatprep.subr.bf16.mxu0 0
        %738 = vmatpush1.bf16.msra.mxu0 0
        %739 = vmatprep.subr.bf16.mxu0 0
        %740 = vmatpush1.bf16.msra.mxu0 0
        %741 = vmatprep.mubr.bf16.mxu0 0
        %742 = vmatmul.mubr.bf16.gmra.mrb[0].mxu0 %v481
        %v743 = vpop.f32.mrb[0].mxu0
        %v744 = vadd.f32 0.0, %v743
        %v745 = vpop.f32.mrb[0].mxu0
        %v746 = vpop.f32.mrb[0].mxu0
        %v747 = vpop.f32.mrb[0].mxu0
        %748 = vdwg.mxu0
        %v749 = vpack.c.bf16 %v744, %v744
        %v751 = vand.u32 %v749, %v534
        %753 = vmatprep.subr.bf16.mxu0 0
        %754 = vmatpush1.bf16.msra.mxu0 %v751
        %755 = vmatprep.subr.bf16.mxu0 0
        %756 = vmatpush1.bf16.msra.mxu0 0
        %757 = vmatprep.subr.bf16.mxu0 0
        %758 = vmatpush1.bf16.msra.mxu0 0
        %759 = vmatprep.subr.bf16.mxu0 0
        %760 = vmatpush1.bf16.msra.mxu0 0
        %761 = vmatprep.subr.bf16.mxu0 0
        %762 = vmatpush1.bf16.msra.mxu0 0
        %763 = vmatprep.subr.bf16.mxu0 0
        %764 = vmatpush1.bf16.msra.mxu0 0
        %765 = vmatprep.subr.bf16.mxu0 0
        %766 = vmatpush1.bf16.msra.mxu0 0
        %767 = vmatprep.subr.bf16.mxu0 0
        %768 = vmatpush1.bf16.msra.mxu0 0
        %769 = vmatprep.subr.bf16.mxu0 0
        %770 = vmatpush1.bf16.msra.mxu0 0
        %771 = vmatprep.subr.bf16.mxu0 0
        %772 = vmatpush1.bf16.msra.mxu0 0
        %773 = vmatprep.subr.bf16.mxu0 0
        %774 = vmatpush1.bf16.msra.mxu0 0
        %775 = vmatprep.subr.bf16.mxu0 0
        %776 = vmatpush1.bf16.msra.mxu0 0
        %777 = vmatprep.subr.bf16.mxu0 0
        %778 = vmatpush1.bf16.msra.mxu0 0
        %779 = vmatprep.subr.bf16.mxu0 0
        %780 = vmatpush1.bf16.msra.mxu0 0
        %781 = vmatprep.subr.bf16.mxu0 0
        %782 = vmatpush1.bf16.msra.mxu0 0
        %783 = vmatprep.subr.bf16.mxu0 0
        %784 = vmatpush1.bf16.msra.mxu0 0
        %785 = vmatprep.mubr.bf16.mxu0 0
        %786 = vmatmul.mubr.bf16.gmra.mrb[0].mxu0 %v530
        %v787 = vpop.f32.mrb[0].mxu0
        %v788 = vadd.f32 0.0, %v787
        %v789 = vpop.f32.mrb[0].mxu0
        %v790 = vpop.f32.mrb[0].mxu0
        %v791 = vpop.f32.mrb[0].mxu0
        %792 = vdwg.mxu0
        %794 = vrot.lane.b32.xlu0 %v788, 96
        %v795 = vpop.permute.xlu0 %794
        %797 = vrot.lane.b32.xlu0 %v788, 32
        %v798 = vpop.permute.xlu0 %797
        %v800 = vsel %vm428, %v795, %v798
        %v801 = vmul.f32 %v477, %v800
        %v802 = vpack.c.bf16 %v801, %v801
        %v804 = vsel %vm612, %v802, 0
        %806 = vmatprep.subr.bf16.mxu0 0
        %807 = vmatpush1.bf16.msra.mxu0 %v604
        %808 = vmatprep.subr.bf16.mxu0 0
        %809 = vmatpush1.bf16.msra.mxu0 %v605
        %810 = vmatprep.subr.bf16.mxu0 0
        %811 = vmatpush1.bf16.msra.mxu0 %v606
        %812 = vmatprep.subr.bf16.mxu0 0
        %813 = vmatpush1.bf16.msra.mxu0 %v607
        %814 = vmatprep.subr.bf16.mxu0 0
        %815 = vmatpush1.bf16.msra.mxu0 0
        %816 = vmatprep.subr.bf16.mxu0 0
        %817 = vmatpush1.bf16.msra.mxu0 0
        %818 = vmatprep.subr.bf16.mxu0 0
        %819 = vmatpush1.bf16.msra.mxu0 0
        %820 = vmatprep.subr.bf16.mxu0 0
        %821 = vmatpush1.bf16.msra.mxu0 0
        %822 = vmatprep.subr.bf16.mxu0 0
        %823 = vmatpush1.bf16.msra.mxu0 0
        %824 = vmatprep.subr.bf16.mxu0 0
        %825 = vmatpush1.bf16.msra.mxu0 0
        %826 = vmatprep.subr.bf16.mxu0 0
        %827 = vmatpush1.bf16.msra.mxu0 0
        %828 = vmatprep.subr.bf16.mxu0 0
        %829 = vmatpush1.bf16.msra.mxu0 0
        %830 = vmatprep.subr.bf16.mxu0 0
        %831 = vmatpush1.bf16.msra.mxu0 0
        %832 = vmatprep.subr.bf16.mxu0 0
        %833 = vmatpush1.bf16.msra.mxu0 0
        %834 = vmatprep.subr.bf16.mxu0 0
        %835 = vmatpush1.bf16.msra.mxu0 0
        %836 = vmatprep.subr.bf16.mxu0 0
        %837 = vmatpush1.bf16.msra.mxu0 0
        %838 = vmatprep.mubr.bf16.mxu0 0
        %839 = vmatmul.mubr.bf16.gmra.mrb[0].mxu0 %v804
        %v840 = vpop.f32.mrb[0].mxu0
        %v841 = vadd.f32 0.0, %v840
        %v842 = vpop.f32.mrb[0].mxu0
        %v843 = vpop.f32.mrb[0].mxu0
        %v844 = vpop.f32.mrb[0].mxu0
        %845 = vdwg.mxu0
        %vm846 = vcmask 64544
        %v847 = vsel %vm846, %v841, -inf
        %v848 = vrot.slane %v847, 4
        %v849 = vmax.f32 %v847, %v848
        %v850 = vrot.slane %v849, 2
        %v851 = vmax.f32 %v849, %v850
        %v852 = vrot.slane %v851, 1
        %v853 = vmax.f32 %v851, %v852
        %v854 = vsub.f32 %v841, %v853
        %v855 = vmul.f32 %v854, 1.442695
        %v856 = vpow.pop %v855
        %v857 = vpack.c.bf16 %v856, %v856
        %859 = vrot.lane.b32.xlu0 %v857, 124
        %v860 = vpop.permute.xlu0 %859
        %v862 = vsel %vm483, %v860, 0
        %864 = vmatprep.subr.bf16.mxu0 0
        %865 = vmatpush1.bf16.msra.mxu0 %v862
        %866 = vmatprep.subr.bf16.mxu0 0
        %867 = vmatpush1.bf16.msra.mxu0 0
        %868 = vmatprep.subr.bf16.mxu0 0
        %869 = vmatpush1.bf16.msra.mxu0 0
        %870 = vmatprep.subr.bf16.mxu0 0
        %871 = vmatpush1.bf16.msra.mxu0 0
        %872 = vmatprep.subr.bf16.mxu0 0
        %873 = vmatpush1.bf16.msra.mxu0 0
        %874 = vmatprep.subr.bf16.mxu0 0
        %875 = vmatpush1.bf16.msra.mxu0 0
        %876 = vmatprep.subr.bf16.mxu0 0
        %877 = vmatpush1.bf16.msra.mxu0 0
        %878 = vmatprep.subr.bf16.mxu0 0
        %879 = vmatpush1.bf16.msra.mxu0 0
        %880 = vmatprep.subr.bf16.mxu0 0
        %881 = vmatpush1.bf16.msra.mxu0 0
        %882 = vmatprep.subr.bf16.mxu0 0
        %883 = vmatpush1.bf16.msra.mxu0 0
        %884 = vmatprep.subr.bf16.mxu0 0
        %885 = vmatpush1.bf16.msra.mxu0 0
        %886 = vmatprep.subr.bf16.mxu0 0
        %887 = vmatpush1.bf16.msra.mxu0 0
        %888 = vmatprep.subr.bf16.mxu0 0
        %889 = vmatpush1.bf16.msra.mxu0 0
        %890 = vmatprep.subr.bf16.mxu0 0
        %891 = vmatpush1.bf16.msra.mxu0 0
        %892 = vmatprep.subr.bf16.mxu0 0
        %893 = vmatpush1.bf16.msra.mxu0 0
        %894 = vmatprep.subr.bf16.mxu0 0
        %895 = vmatpush1.bf16.msra.mxu0 0
        %896 = vmatprep.mubr.bf16.mxu0 0
        %897 = vmatmul.mubr.bf16.gmra.mrb[0].mxu0 %v481
        %v898 = vpop.f32.mrb[0].mxu0
        %v899 = vadd.f32 0.0, %v898
        %v900 = vpop.f32.mrb[0].mxu0
        %v901 = vpop.f32.mrb[0].mxu0
        %v902 = vpop.f32.mrb[0].mxu0
        %903 = vdwg.mxu0
        %v904 = vpack.c.bf16 %v899, %v899
        %v906 = vand.u32 %v904, %v534
        %908 = vmatprep.subr.bf16.mxu0 0
        %909 = vmatpush1.bf16.msra.mxu0 %v906
        %910 = vmatprep.subr.bf16.mxu0 0
        %911 = vmatpush1.bf16.msra.mxu0 0
        %912 = vmatprep.subr.bf16.mxu0 0
        %913 = vmatpush1.bf16.msra.mxu0 0
        %914 = vmatprep.subr.bf16.mxu0 0
        %915 = vmatpush1.bf16.msra.mxu0 0
        %916 = vmatprep.subr.bf16.mxu0 0
        %917 = vmatpush1.bf16.msra.mxu0 0
        %918 = vmatprep.subr.bf16.mxu0 0
        %919 = vmatpush1.bf16.msra.mxu0 0
        %920 = vmatprep.subr.bf16.mxu0 0
        %921 = vmatpush1.bf16.msra.mxu0 0
        %922 = vmatprep.subr.bf16.mxu0 0
        %923 = vmatpush1.bf16.msra.mxu0 0
        %924 = vmatprep.subr.bf16.mxu0 0
        %925 = vmatpush1.bf16.msra.mxu0 0
        %926 = vmatprep.subr.bf16.mxu0 0
        %927 = vmatpush1.bf16.msra.mxu0 0
        %928 = vmatprep.subr.bf16.mxu0 0
        %929 = vmatpush1.bf16.msra.mxu0 0
        %930 = vmatprep.subr.bf16.mxu0 0
        %931 = vmatpush1.bf16.msra.mxu0 0
        %932 = vmatprep.subr.bf16.mxu0 0
        %933 = vmatpush1.bf16.msra.mxu0 0
        %934 = vmatprep.subr.bf16.mxu0 0
        %935 = vmatpush1.bf16.msra.mxu0 0
        %936 = vmatprep.subr.bf16.mxu0 0
        %937 = vmatpush1.bf16.msra.mxu0 0
        %938 = vmatprep.subr.bf16.mxu0 0
        %939 = vmatpush1.bf16.msra.mxu0 0
        %940 = vmatprep.mubr.bf16.mxu0 0
        %941 = vmatmul.mubr.bf16.gmra.mrb[0].mxu0 %v530
        %v942 = vpop.f32.mrb[0].mxu0
        %v943 = vadd.f32 0.0, %v942
        %v944 = vpop.f32.mrb[0].mxu0
        %v945 = vpop.f32.mrb[0].mxu0
        %v946 = vpop.f32.mrb[0].mxu0
        %947 = vdwg.mxu0
        %v948 = vrcp.pop %v943
        %950 = vrot.lane.b32.xlu0 %v948, 4
        %v951 = vpop.permute.xlu0 %950
        %v953 = vmul.f32 %v856, %v951
        %v954 = vxor.u32 %v841, 2147483648
        %v955 = vmul.f32 %v954, 1.442695
        %v956 = vpow.pop %v955
        %v957 = vadd.f32 %v956, 1.0
        %v958 = vrcp.pop %v957
        %v959 = vmul.f32 1.0, %v958
        %vm960 = vcmask 31744
        %v961 = vsel %vm960, %v959, %v953
        %v962 = vpack.c.bf16 %v961, %v961
        %v964 = vsel %vm479, %v962, 0
        %966 = vmatprep.subr.bf16.mxu0 0
        %967 = vmatpush1.bf16.msra.mxu0 %v662
        %968 = vmatprep.subr.bf16.mxu0 0
        %969 = vmatpush1.bf16.msra.mxu0 0
        %970 = vmatprep.subr.bf16.mxu0 0
        %971 = vmatpush1.bf16.msra.mxu0 0
        %972 = vmatprep.subr.bf16.mxu0 0
        %973 = vmatpush1.bf16.msra.mxu0 0
        %974 = vmatprep.subr.bf16.mxu0 0
        %975 = vmatpush1.bf16.msra.mxu0 0
        %976 = vmatprep.subr.bf16.mxu0 0
        %977 = vmatpush1.bf16.msra.mxu0 0
        %978 = vmatprep.subr.bf16.mxu0 0
        %979 = vmatpush1.bf16.msra.mxu0 0
        %980 = vmatprep.subr.bf16.mxu0 0
        %981 = vmatpush1.bf16.msra.mxu0 0
        %982 = vmatprep.subr.bf16.mxu0 0
        %983 = vmatpush1.bf16.msra.mxu0 0
        %984 = vmatprep.subr.bf16.mxu0 0
        %985 = vmatpush1.bf16.msra.mxu0 0
        %986 = vmatprep.subr.bf16.mxu0 0
        %987 = vmatpush1.bf16.msra.mxu0 0
        %988 = vmatprep.subr.bf16.mxu0 0
        %989 = vmatpush1.bf16.msra.mxu0 0
        %990 = vmatprep.subr.bf16.mxu0 0
        %991 = vmatpush1.bf16.msra.mxu0 0
        %992 = vmatprep.subr.bf16.mxu0 0
        %993 = vmatpush1.bf16.msra.mxu0 0
        %994 = vmatprep.subr.bf16.mxu0 0
        %995 = vmatpush1.bf16.msra.mxu0 0
        %996 = vmatprep.subr.bf16.mxu0 0
        %997 = vmatpush1.bf16.msra.mxu0 0
        %998 = vmatprep.mubr.bf16.mxu0 0
        %999 = vmatmul.mubr.bf16.gmra.mrb[0].mxu0 %v964
        %v1000 = vpop.f32.mrb[0].mxu0
        %v1001 = vadd.f32 0.0, %v1000
        %v1002 = vpop.f32.mrb[0].mxu0
        %v1003 = vpop.f32.mrb[0].mxu0
        %v1004 = vpop.f32.mrb[0].mxu0
        %1005 = vdwg.mxu0
        %1007 = vrot.lane.b32.xlu0 %v1001, 32
        %v1008 = vpop.permute.xlu0 %1007
        %v1010 = vmul.f32 %v467, %v1008
        %1012 = vrot.lane.b32.xlu0 %v477, 96
        %v1013 = vpop.permute.xlu0 %1012
        %1015 = vrot.lane.b32.xlu0 %v477, 104
        %v1016 = vpop.permute.xlu0 %1015
        %1018 = vrot.lane.b32.xlu0 %v477, 112
        %v1019 = vpop.permute.xlu0 %1018
        %1021 = vrot.lane.b32.xlu0 %v477, 120
        %v1022 = vpop.permute.xlu0 %1021
        %v1024 = vsel %vm479, %v1013, %v1016
        %vm1025 = vcmask 130048
        %v1026 = vsel %vm1025, %v1024, %v1019
        %vm1027 = vcmask 195584
        %v1028 = vsel %vm1027, %v1026, %v1022
        %1030 = vrot.lane.b32.xlu0 %v1010, 64
        %v1031 = vpop.permute.xlu0 %1030
        %1033 = vrot.lane.b32.xlu0 %v1010, 72
        %v1034 = vpop.permute.xlu0 %1033
        %1036 = vrot.lane.b32.xlu0 %v1010, 80
        %v1037 = vpop.permute.xlu0 %1036
        %1039 = vrot.lane.b32.xlu0 %v1010, 88
        %v1040 = vpop.permute.xlu0 %1039
        %v1042 = vsel %vm479, %v1031, %v1034
        %v1043 = vsel %vm1025, %v1042, %v1037
        %v1044 = vsel %vm1027, %v1043, %v1040
        %v1045 = vmul.f32 %v704, %v1028
        %v1046 = vpack.c.bf16 %v1045, %v1045
        %v1051 = vunpack.c.l.b16 %v394
        %v1052 = vunpack.c.l.b16 %v395
        %v1053 = vunpack.c.l.b16 %v396
        %v1054 = vunpack.c.l.b16 %v397
        %v1055 = vpack.c.b16 %v1052, %v1051
        %v1056 = vpack.c.b16 %v1054, %v1053
        %v1060 = vsel %vm428, %v1046, 0
        %1062 = vmatprep.subr.bf16.mxu0 0
        %1063 = vmatpush1.bf16.msra.mxu0 %v1055
        %1064 = vmatprep.subr.bf16.mxu0 0
        %1065 = vmatpush1.bf16.msra.mxu0 %v1056
        %1066 = vmatprep.subr.bf16.mxu0 0
        %1067 = vmatpush1.bf16.msra.mxu0 0
        %1068 = vmatprep.subr.bf16.mxu0 0
        %1069 = vmatpush1.bf16.msra.mxu0 0
        %1070 = vmatprep.subr.bf16.mxu0 0
        %1071 = vmatpush1.bf16.msra.mxu0 0
        %1072 = vmatprep.subr.bf16.mxu0 0
        %1073 = vmatpush1.bf16.msra.mxu0 0
        %1074 = vmatprep.subr.bf16.mxu0 0
        %1075 = vmatpush1.bf16.msra.mxu0 0
        %1076 = vmatprep.subr.bf16.mxu0 0
        %1077 = vmatpush1.bf16.msra.mxu0 0
        %1078 = vmatprep.subr.bf16.mxu0 0
        %1079 = vmatpush1.bf16.msra.mxu0 0
        %1080 = vmatprep.subr.bf16.mxu0 0
        %1081 = vmatpush1.bf16.msra.mxu0 0
        %1082 = vmatprep.subr.bf16.mxu0 0
        %1083 = vmatpush1.bf16.msra.mxu0 0
        %1084 = vmatprep.subr.bf16.mxu0 0
        %1085 = vmatpush1.bf16.msra.mxu0 0
        %1086 = vmatprep.subr.bf16.mxu0 0
        %1087 = vmatpush1.bf16.msra.mxu0 0
        %1088 = vmatprep.subr.bf16.mxu0 0
        %1089 = vmatpush1.bf16.msra.mxu0 0
        %1090 = vmatprep.subr.bf16.mxu0 0
        %1091 = vmatpush1.bf16.msra.mxu0 0
        %1092 = vmatprep.subr.bf16.mxu0 0
        %1093 = vmatpush1.bf16.msra.mxu0 0
        %1094 = vmatprep.mubr.bf16.mxu0 0
        %1095 = vmatmul.mubr.bf16.gmra.mrb[0].mxu0 %v1060
        %v1096 = vpop.f32.mrb[0].mxu0
        %v1097 = vadd.f32 0.0, %v1096
        %v1098 = vpop.f32.mrb[0].mxu0
        %v1099 = vpop.f32.mrb[0].mxu0
        %v1100 = vpop.f32.mrb[0].mxu0
        %1101 = vdwg.mxu0
        %v1102 = vpack.c.bf16 %v1097, %v1097
        %v1104 = vsel %vm960, %v1102, 0
        %vm1106 = vcmask 1041408
        %v1108 = vsel %vm1106, %v398, 0
        %1110 = vmatprep.subr.bf16.mxu0 0
        %1111 = vmatpush1.bf16.msra.mxu0 %v1108
        %1112 = vmatprep.subr.bf16.mxu0 0
        %1113 = vmatpush1.bf16.msra.mxu0 0
        %1114 = vmatprep.subr.bf16.mxu0 0
        %1115 = vmatpush1.bf16.msra.mxu0 0
        %1116 = vmatprep.subr.bf16.mxu0 0
        %1117 = vmatpush1.bf16.msra.mxu0 0
        %1118 = vmatprep.subr.bf16.mxu0 0
        %1119 = vmatpush1.bf16.msra.mxu0 0
        %1120 = vmatprep.subr.bf16.mxu0 0
        %1121 = vmatpush1.bf16.msra.mxu0 0
        %1122 = vmatprep.subr.bf16.mxu0 0
        %1123 = vmatpush1.bf16.msra.mxu0 0
        %1124 = vmatprep.subr.bf16.mxu0 0
        %1125 = vmatpush1.bf16.msra.mxu0 0
        %1126 = vmatprep.subr.bf16.mxu0 0
        %1127 = vmatpush1.bf16.msra.mxu0 0
        %1128 = vmatprep.subr.bf16.mxu0 0
        %1129 = vmatpush1.bf16.msra.mxu0 0
        %1130 = vmatprep.subr.bf16.mxu0 0
        %1131 = vmatpush1.bf16.msra.mxu0 0
        %1132 = vmatprep.subr.bf16.mxu0 0
        %1133 = vmatpush1.bf16.msra.mxu0 0
        %1134 = vmatprep.subr.bf16.mxu0 0
        %1135 = vmatpush1.bf16.msra.mxu0 0
        %1136 = vmatprep.subr.bf16.mxu0 0
        %1137 = vmatpush1.bf16.msra.mxu0 0
        %1138 = vmatprep.subr.bf16.mxu0 0
        %1139 = vmatpush1.bf16.msra.mxu0 0
        %1140 = vmatprep.subr.bf16.mxu0 0
        %1141 = vmatpush1.bf16.msra.mxu0 0
        %1142 = vmatprep.mubr.bf16.mxu0 0
        %1143 = vmatmul.mubr.bf16.gmra.mrb[0].mxu0 %v1104
        %v1144 = vpop.f32.mrb[0].mxu0
        %v1145 = vadd.f32 0.0, %v1144
        %v1146 = vpop.f32.mrb[0].mxu0
        %v1147 = vpop.f32.mrb[0].mxu0
        %v1148 = vpop.f32.mrb[0].mxu0
        %1149 = vdwg.mxu0
        %v1150 = vmul.f32 %v1145, %v1044
        %v1151 = vadd.f32 %v1150, 0.0
        %1152 = vrot.lane.b32.xlu0 %v477, 88
        %v1153 = vpop.permute.xlu0 %1152
        %v1155 = vsel %vm479, %v1153, %v1013
        %v1156 = vsel %vm1025, %v1155, %v1016
        %v1157 = vsel %vm1027, %v1156, %v1019
        %1158 = vrot.lane.b32.xlu0 %v1010, 56
        %v1159 = vpop.permute.xlu0 %1158
        %v1161 = vsel %vm479, %v1159, %v1031
        %v1162 = vsel %vm1025, %v1161, %v1034
        %v1163 = vsel %vm1027, %v1162, %v1037
        %v1164 = vmul.f32 %v704, %v1157
        %v1165 = vpack.c.bf16 %v1164, %v1164
        %v1167 = vsel %vm428, %v1165, 0
        %1169 = vmatprep.subr.bf16.mxu0 0
        %1170 = vmatpush1.bf16.msra.mxu0 %v1055
        %1171 = vmatprep.subr.bf16.mxu0 0
        %1172 = vmatpush1.bf16.msra.mxu0 %v1056
        %1173 = vmatprep.subr.bf16.mxu0 0
        %1174 = vmatpush1.bf16.msra.mxu0 0
        %1175 = vmatprep.subr.bf16.mxu0 0
        %1176 = vmatpush1.bf16.msra.mxu0 0
        %1177 = vmatprep.subr.bf16.mxu0 0
        %1178 = vmatpush1.bf16.msra.mxu0 0
        %1179 = vmatprep.subr.bf16.mxu0 0
        %1180 = vmatpush1.bf16.msra.mxu0 0
        %1181 = vmatprep.subr.bf16.mxu0 0
        %1182 = vmatpush1.bf16.msra.mxu0 0
        %1183 = vmatprep.subr.bf16.mxu0 0
        %1184 = vmatpush1.bf16.msra.mxu0 0
        %1185 = vmatprep.subr.bf16.mxu0 0
        %1186 = vmatpush1.bf16.msra.mxu0 0
        %1187 = vmatprep.subr.bf16.mxu0 0
        %1188 = vmatpush1.bf16.msra.mxu0 0
        %1189 = vmatprep.subr.bf16.mxu0 0
        %1190 = vmatpush1.bf16.msra.mxu0 0
        %1191 = vmatprep.subr.bf16.mxu0 0
        %1192 = vmatpush1.bf16.msra.mxu0 0
        %1193 = vmatprep.subr.bf16.mxu0 0
        %1194 = vmatpush1.bf16.msra.mxu0 0
        %1195 = vmatprep.subr.bf16.mxu0 0
        %1196 = vmatpush1.bf16.msra.mxu0 0
        %1197 = vmatprep.subr.bf16.mxu0 0
        %1198 = vmatpush1.bf16.msra.mxu0 0
        %1199 = vmatprep.subr.bf16.mxu0 0
        %1200 = vmatpush1.bf16.msra.mxu0 0
        %1201 = vmatprep.mubr.bf16.mxu0 0
        %1202 = vmatmul.mubr.bf16.gmra.mrb[0].mxu0 %v1167
        %v1203 = vpop.f32.mrb[0].mxu0
        %v1204 = vadd.f32 0.0, %v1203
        %v1205 = vpop.f32.mrb[0].mxu0
        %v1206 = vpop.f32.mrb[0].mxu0
        %v1207 = vpop.f32.mrb[0].mxu0
        %1208 = vdwg.mxu0
        %v1209 = vpack.c.bf16 %v1204, %v1204
        %v1211 = vsel %vm960, %v1209, 0
        %1213 = vmatprep.subr.bf16.mxu0 0
        %1214 = vmatpush1.bf16.msra.mxu0 %v1108
        %1215 = vmatprep.subr.bf16.mxu0 0
        %1216 = vmatpush1.bf16.msra.mxu0 0
        %1217 = vmatprep.subr.bf16.mxu0 0
        %1218 = vmatpush1.bf16.msra.mxu0 0
        %1219 = vmatprep.subr.bf16.mxu0 0
        %1220 = vmatpush1.bf16.msra.mxu0 0
        %1221 = vmatprep.subr.bf16.mxu0 0
        %1222 = vmatpush1.bf16.msra.mxu0 0
        %1223 = vmatprep.subr.bf16.mxu0 0
        %1224 = vmatpush1.bf16.msra.mxu0 0
        %1225 = vmatprep.subr.bf16.mxu0 0
        %1226 = vmatpush1.bf16.msra.mxu0 0
        %1227 = vmatprep.subr.bf16.mxu0 0
        %1228 = vmatpush1.bf16.msra.mxu0 0
        %1229 = vmatprep.subr.bf16.mxu0 0
        %1230 = vmatpush1.bf16.msra.mxu0 0
        %1231 = vmatprep.subr.bf16.mxu0 0
        %1232 = vmatpush1.bf16.msra.mxu0 0
        %1233 = vmatprep.subr.bf16.mxu0 0
        %1234 = vmatpush1.bf16.msra.mxu0 0
        %1235 = vmatprep.subr.bf16.mxu0 0
        %1236 = vmatpush1.bf16.msra.mxu0 0
        %1237 = vmatprep.subr.bf16.mxu0 0
        %1238 = vmatpush1.bf16.msra.mxu0 0
        %1239 = vmatprep.subr.bf16.mxu0 0
        %1240 = vmatpush1.bf16.msra.mxu0 0
        %1241 = vmatprep.subr.bf16.mxu0 0
        %1242 = vmatpush1.bf16.msra.mxu0 0
        %1243 = vmatprep.subr.bf16.mxu0 0
        %1244 = vmatpush1.bf16.msra.mxu0 0
        %1245 = vmatprep.mubr.bf16.mxu0 0
        %1246 = vmatmul.mubr.bf16.gmra.mrb[0].mxu0 %v1211
        %v1247 = vpop.f32.mrb[0].mxu0
        %v1248 = vadd.f32 0.0, %v1247
        %v1249 = vpop.f32.mrb[0].mxu0
        %v1250 = vpop.f32.mrb[0].mxu0
        %v1251 = vpop.f32.mrb[0].mxu0
        %1252 = vdwg.mxu0
        %v1253 = vmul.f32 %v1248, %v1163
        %v1254 = vadd.f32 %v1151, %v1253
        %1255 = vrot.lane.b32.xlu0 %v477, 80
        %v1256 = vpop.permute.xlu0 %1255
        %v1258 = vsel %vm479, %v1256, %v1153
        %v1259 = vsel %vm1025, %v1258, %v1013
        %v1260 = vsel %vm1027, %v1259, %v1016
        %1261 = vrot.lane.b32.xlu0 %v1010, 48
        %v1262 = vpop.permute.xlu0 %1261
        %v1264 = vsel %vm479, %v1262, %v1159
        %v1265 = vsel %vm1025, %v1264, %v1031
        %v1266 = vsel %vm1027, %v1265, %v1034
        %v1267 = vmul.f32 %v704, %v1260
        %v1268 = vpack.c.bf16 %v1267, %v1267
        %v1270 = vsel %vm428, %v1268, 0
        %1272 = vmatprep.subr.bf16.mxu0 0
        %1273 = vmatpush1.bf16.msra.mxu0 %v1055
        %1274 = vmatprep.subr.bf16.mxu0 0
        %1275 = vmatpush1.bf16.msra.mxu0 %v1056
        %1276 = vmatprep.subr.bf16.mxu0 0
        %1277 = vmatpush1.bf16.msra.mxu0 0
        %1278 = vmatprep.subr.bf16.mxu0 0
        %1279 = vmatpush1.bf16.msra.mxu0 0
        %1280 = vmatprep.subr.bf16.mxu0 0
        %1281 = vmatpush1.bf16.msra.mxu0 0
        %1282 = vmatprep.subr.bf16.mxu0 0
        %1283 = vmatpush1.bf16.msra.mxu0 0
        %1284 = vmatprep.subr.bf16.mxu0 0
        %1285 = vmatpush1.bf16.msra.mxu0 0
        %1286 = vmatprep.subr.bf16.mxu0 0
        %1287 = vmatpush1.bf16.msra.mxu0 0
        %1288 = vmatprep.subr.bf16.mxu0 0
        %1289 = vmatpush1.bf16.msra.mxu0 0
        %1290 = vmatprep.subr.bf16.mxu0 0
        %1291 = vmatpush1.bf16.msra.mxu0 0
        %1292 = vmatprep.subr.bf16.mxu0 0
        %1293 = vmatpush1.bf16.msra.mxu0 0
        %1294 = vmatprep.subr.bf16.mxu0 0
        %1295 = vmatpush1.bf16.msra.mxu0 0
        %1296 = vmatprep.subr.bf16.mxu0 0
        %1297 = vmatpush1.bf16.msra.mxu0 0
        %1298 = vmatprep.subr.bf16.mxu0 0
        %1299 = vmatpush1.bf16.msra.mxu0 0
        %1300 = vmatprep.subr.bf16.mxu0 0
        %1301 = vmatpush1.bf16.msra.mxu0 0
        %1302 = vmatprep.subr.bf16.mxu0 0
        %1303 = vmatpush1.bf16.msra.mxu0 0
        %1304 = vmatprep.mubr.bf16.mxu0 0
        %1305 = vmatmul.mubr.bf16.gmra.mrb[0].mxu0 %v1270
        %v1306 = vpop.f32.mrb[0].mxu0
        %v1307 = vadd.f32 0.0, %v1306
        %v1308 = vpop.f32.mrb[0].mxu0
        %v1309 = vpop.f32.mrb[0].mxu0
        %v1310 = vpop.f32.mrb[0].mxu0
        %1311 = vdwg.mxu0
        %v1312 = vpack.c.bf16 %v1307, %v1307
        %v1314 = vsel %vm960, %v1312, 0
        %1316 = vmatprep.subr.bf16.mxu0 0
        %1317 = vmatpush1.bf16.msra.mxu0 %v1108
        %1318 = vmatprep.subr.bf16.mxu0 0
        %1319 = vmatpush1.bf16.msra.mxu0 0
        %1320 = vmatprep.subr.bf16.mxu0 0
        %1321 = vmatpush1.bf16.msra.mxu0 0
        %1322 = vmatprep.subr.bf16.mxu0 0
        %1323 = vmatpush1.bf16.msra.mxu0 0
        %1324 = vmatprep.subr.bf16.mxu0 0
        %1325 = vmatpush1.bf16.msra.mxu0 0
        %1326 = vmatprep.subr.bf16.mxu0 0
        %1327 = vmatpush1.bf16.msra.mxu0 0
        %1328 = vmatprep.subr.bf16.mxu0 0
        %1329 = vmatpush1.bf16.msra.mxu0 0
        %1330 = vmatprep.subr.bf16.mxu0 0
        %1331 = vmatpush1.bf16.msra.mxu0 0
        %1332 = vmatprep.subr.bf16.mxu0 0
        %1333 = vmatpush1.bf16.msra.mxu0 0
        %1334 = vmatprep.subr.bf16.mxu0 0
        %1335 = vmatpush1.bf16.msra.mxu0 0
        %1336 = vmatprep.subr.bf16.mxu0 0
        %1337 = vmatpush1.bf16.msra.mxu0 0
        %1338 = vmatprep.subr.bf16.mxu0 0
        %1339 = vmatpush1.bf16.msra.mxu0 0
        %1340 = vmatprep.subr.bf16.mxu0 0
        %1341 = vmatpush1.bf16.msra.mxu0 0
        %1342 = vmatprep.subr.bf16.mxu0 0
        %1343 = vmatpush1.bf16.msra.mxu0 0
        %1344 = vmatprep.subr.bf16.mxu0 0
        %1345 = vmatpush1.bf16.msra.mxu0 0
        %1346 = vmatprep.subr.bf16.mxu0 0
        %1347 = vmatpush1.bf16.msra.mxu0 0
        %1348 = vmatprep.mubr.bf16.mxu0 0
        %1349 = vmatmul.mubr.bf16.gmra.mrb[0].mxu0 %v1314
        %v1350 = vpop.f32.mrb[0].mxu0
        %v1351 = vadd.f32 0.0, %v1350
        %v1352 = vpop.f32.mrb[0].mxu0
        %v1353 = vpop.f32.mrb[0].mxu0
        %v1354 = vpop.f32.mrb[0].mxu0
        %1355 = vdwg.mxu0
        %v1356 = vmul.f32 %v1351, %v1266
        %v1357 = vadd.f32 %v1254, %v1356
        %1358 = vrot.lane.b32.xlu0 %v477, 72
        %v1359 = vpop.permute.xlu0 %1358
        %v1361 = vsel %vm479, %v1359, %v1256
        %v1362 = vsel %vm1025, %v1361, %v1153
        %v1363 = vsel %vm1027, %v1362, %v1013
        %1364 = vrot.lane.b32.xlu0 %v1010, 40
        %v1365 = vpop.permute.xlu0 %1364
        %v1367 = vsel %vm479, %v1365, %v1262
        %v1368 = vsel %vm1025, %v1367, %v1159
        %v1369 = vsel %vm1027, %v1368, %v1031
        %v1370 = vmul.f32 %v704, %v1363
        %v1371 = vpack.c.bf16 %v1370, %v1370
        %v1373 = vsel %vm428, %v1371, 0
        %1375 = vmatprep.subr.bf16.mxu0 0
        %1376 = vmatpush1.bf16.msra.mxu0 %v1055
        %1377 = vmatprep.subr.bf16.mxu0 0
        %1378 = vmatpush1.bf16.msra.mxu0 %v1056
        %1379 = vmatprep.subr.bf16.mxu0 0
        %1380 = vmatpush1.bf16.msra.mxu0 0
        %1381 = vmatprep.subr.bf16.mxu0 0
        %1382 = vmatpush1.bf16.msra.mxu0 0
        %1383 = vmatprep.subr.bf16.mxu0 0
        %1384 = vmatpush1.bf16.msra.mxu0 0
        %1385 = vmatprep.subr.bf16.mxu0 0
        %1386 = vmatpush1.bf16.msra.mxu0 0
        %1387 = vmatprep.subr.bf16.mxu0 0
        %1388 = vmatpush1.bf16.msra.mxu0 0
        %1389 = vmatprep.subr.bf16.mxu0 0
        %1390 = vmatpush1.bf16.msra.mxu0 0
        %1391 = vmatprep.subr.bf16.mxu0 0
        %1392 = vmatpush1.bf16.msra.mxu0 0
        %1393 = vmatprep.subr.bf16.mxu0 0
        %1394 = vmatpush1.bf16.msra.mxu0 0
        %1395 = vmatprep.subr.bf16.mxu0 0
        %1396 = vmatpush1.bf16.msra.mxu0 0
        %1397 = vmatprep.subr.bf16.mxu0 0
        %1398 = vmatpush1.bf16.msra.mxu0 0
        %1399 = vmatprep.subr.bf16.mxu0 0
        %1400 = vmatpush1.bf16.msra.mxu0 0
        %1401 = vmatprep.subr.bf16.mxu0 0
        %1402 = vmatpush1.bf16.msra.mxu0 0
        %1403 = vmatprep.subr.bf16.mxu0 0
        %1404 = vmatpush1.bf16.msra.mxu0 0
        %1405 = vmatprep.subr.bf16.mxu0 0
        %1406 = vmatpush1.bf16.msra.mxu0 0
        %1407 = vmatprep.mubr.bf16.mxu0 0
        %1408 = vmatmul.mubr.bf16.gmra.mrb[0].mxu0 %v1373
        %v1409 = vpop.f32.mrb[0].mxu0
        %v1410 = vadd.f32 0.0, %v1409
        %v1411 = vpop.f32.mrb[0].mxu0
        %v1412 = vpop.f32.mrb[0].mxu0
        %v1413 = vpop.f32.mrb[0].mxu0
        %1414 = vdwg.mxu0
        %v1415 = vpack.c.bf16 %v1410, %v1410
        %v1417 = vsel %vm960, %v1415, 0
        %1419 = vmatprep.subr.bf16.mxu0 0
        %1420 = vmatpush1.bf16.msra.mxu0 %v1108
        %1421 = vmatprep.subr.bf16.mxu0 0
        %1422 = vmatpush1.bf16.msra.mxu0 0
        %1423 = vmatprep.subr.bf16.mxu0 0
        %1424 = vmatpush1.bf16.msra.mxu0 0
        %1425 = vmatprep.subr.bf16.mxu0 0
        %1426 = vmatpush1.bf16.msra.mxu0 0
        %1427 = vmatprep.subr.bf16.mxu0 0
        %1428 = vmatpush1.bf16.msra.mxu0 0
        %1429 = vmatprep.subr.bf16.mxu0 0
        %1430 = vmatpush1.bf16.msra.mxu0 0
        %1431 = vmatprep.subr.bf16.mxu0 0
        %1432 = vmatpush1.bf16.msra.mxu0 0
        %1433 = vmatprep.subr.bf16.mxu0 0
        %1434 = vmatpush1.bf16.msra.mxu0 0
        %1435 = vmatprep.subr.bf16.mxu0 0
        %1436 = vmatpush1.bf16.msra.mxu0 0
        %1437 = vmatprep.subr.bf16.mxu0 0
        %1438 = vmatpush1.bf16.msra.mxu0 0
        %1439 = vmatprep.subr.bf16.mxu0 0
        %1440 = vmatpush1.bf16.msra.mxu0 0
        %1441 = vmatprep.subr.bf16.mxu0 0
        %1442 = vmatpush1.bf16.msra.mxu0 0
        %1443 = vmatprep.subr.bf16.mxu0 0
        %1444 = vmatpush1.bf16.msra.mxu0 0
        %1445 = vmatprep.subr.bf16.mxu0 0
        %1446 = vmatpush1.bf16.msra.mxu0 0
        %1447 = vmatprep.subr.bf16.mxu0 0
        %1448 = vmatpush1.bf16.msra.mxu0 0
        %1449 = vmatprep.subr.bf16.mxu0 0
        %1450 = vmatpush1.bf16.msra.mxu0 0
        %1451 = vmatprep.mubr.bf16.mxu0 0
        %1452 = vmatmul.mubr.bf16.gmra.mrb[0].mxu0 %v1417
        %v1453 = vpop.f32.mrb[0].mxu0
        %v1454 = vadd.f32 0.0, %v1453
        %v1455 = vpop.f32.mrb[0].mxu0
        %v1456 = vpop.f32.mrb[0].mxu0
        %v1457 = vpop.f32.mrb[0].mxu0
        %1458 = vdwg.mxu0
        %v1459 = vmul.f32 %v1454, %v1369
        %v1460 = vadd.f32 %v1357, %v1459
        %v1461 = vmul.f32 %v1460, %v1001
        %v1462 = vpack.c.bf16 %v1461, %v1461
        %v1464 = vlaneseq
        %v1465 = vshrl.u32 %v1464, 7
        %v1466 = vsub.s32 0, %v1465
        %v1467 = vrot.slane %v393, %v1466
        %v1473 = vunpack.c.l.b16 %v389
        %v1474 = vunpack.c.l.b16 %v390
        %v1475 = vunpack.c.l.b16 %v391
        %v1476 = vunpack.c.l.b16 %v392
        %v1477 = vpack.c.b16 %v1474, %v1473
        %v1478 = vpack.c.b16 %v1476, %v1475
        %v1482 = vsel %vm428, %v1462, 0
        %1484 = vmatprep.subr.bf16.mxu0 0
        %1485 = vmatpush1.bf16.msra.mxu0 %v1477
        %1486 = vmatprep.subr.bf16.mxu0 0
        %1487 = vmatpush1.bf16.msra.mxu0 %v1478
        %1488 = vmatprep.subr.bf16.mxu0 0
        %1489 = vmatpush1.bf16.msra.mxu0 0
        %1490 = vmatprep.subr.bf16.mxu0 0
        %1491 = vmatpush1.bf16.msra.mxu0 0
        %1492 = vmatprep.subr.bf16.mxu0 0
        %1493 = vmatpush1.bf16.msra.mxu0 0
        %1494 = vmatprep.subr.bf16.mxu0 0
        %1495 = vmatpush1.bf16.msra.mxu0 0
        %1496 = vmatprep.subr.bf16.mxu0 0
        %1497 = vmatpush1.bf16.msra.mxu0 0
        %1498 = vmatprep.subr.bf16.mxu0 0
        %1499 = vmatpush1.bf16.msra.mxu0 0
        %1500 = vmatprep.subr.bf16.mxu0 0
        %1501 = vmatpush1.bf16.msra.mxu0 0
        %1502 = vmatprep.subr.bf16.mxu0 0
        %1503 = vmatpush1.bf16.msra.mxu0 0
        %1504 = vmatprep.subr.bf16.mxu0 0
        %1505 = vmatpush1.bf16.msra.mxu0 0
        %1506 = vmatprep.subr.bf16.mxu0 0
        %1507 = vmatpush1.bf16.msra.mxu0 0
        %1508 = vmatprep.subr.bf16.mxu0 0
        %1509 = vmatpush1.bf16.msra.mxu0 0
        %1510 = vmatprep.subr.bf16.mxu0 0
        %1511 = vmatpush1.bf16.msra.mxu0 0
        %1512 = vmatprep.subr.bf16.mxu0 0
        %1513 = vmatpush1.bf16.msra.mxu0 0
        %1514 = vmatprep.subr.bf16.mxu0 0
        %1515 = vmatpush1.bf16.msra.mxu0 0
        %1516 = vmatprep.mubr.bf16.mxu0 0
        %1517 = vmatmul.mubr.bf16.gmra.mrb[0].mxu0 %v1482
        %v1518 = vpop.f32.mrb[0].mxu0
        %v1519 = vadd.f32 %v1467, %v1518
        %v1520 = vpop.f32.mrb[0].mxu0
        %v1521 = vpop.f32.mrb[0].mxu0
        %v1522 = vpop.f32.mrb[0].mxu0
        %1523 = vdwg.mxu0
        %1524 = vst.msk [vmem:[%s377] sm:$0xff] %vm428, %v1519
        %s1525 = sand.u32 %s269, 1
        %s1526 = scalar_lea.sflag [#allocation3], %s1525
        %s1527 = sand.u32 %s269, 1
        %s1528 = smul.addr %s1527, 8
        %s1529 = scalar_lea.vmem [#allocation2], %s1528
        // Predicated region
        $region65: #{tpu_custom_call.1} parent=63 // pred_check
          %p1530 = pneg %p279
        $region66: #{tpu_custom_call.1} parent=63 // pred_check_branch
          %1532 = sbr.rel (%p1530) target = $region68
        $region67: #{tpu_custom_call.1} parent=63 // pred_region
          %s1534 = ssub.s32 128, 128
          %1535 = vsyncadd %s1526, %s1534
          %s1536 = smul.addr %s25, 128
          %s1537 = scalar_lea.hbm %s11, %s1536
          %s1539 = sshll.u32 %s1529, 4
          %s1540 = int_to_ptr.vmem [resolvable:$true] %s1539
          %1542 = dma.vmem_to_hbm [thread:$0]  %s1540, 128, %s1537, %s1526
        $region68: #{tpu_custom_call.1} parent=63 // pred_fallthru
          _
      $region64: #{tpu_custom_call.1} parent=5 // pred_fallthru
        _
      %p1543 = scmp.le.s32.totalorder 2, %s20
      // Predicated region
      $region69: #{tpu_custom_call.1} parent=5 // pred_check
        %p1544 = pneg %p1543
      $region70: #{tpu_custom_call.1} parent=5 // pred_check_branch
        %1546 = sbr.rel (%p1544) target = $region72
      $region71: #{tpu_custom_call.1} parent=5 // pred_region
        %s1547 = ssub.s32 %s20, 2
        // Predicated region
        $region73: #{tpu_custom_call.1} parent=71 // pred_check
          %p1548 = pneg %p285
        $region74: #{tpu_custom_call.1} parent=71 // pred_check_branch
          %1550 = sbr.rel (%p1548) target = $region76
        $region75: #{tpu_custom_call.1} parent=71 // pred_region
          %s1551 = sand.u32 %s270, 1
          %s1552 = scalar_lea.sflag [#allocation3], %s1551
          %s1553 = sand.u32 %s270, 1
          %s1554 = smul.addr %s1553, 8
          %s1555 = scalar_lea.vmem [#allocation2], %s1554
          %1556 = dma.done %s1552, 128
        $region76: #{tpu_custom_call.1} parent=71 // pred_fallthru
          _
      $region72: #{tpu_custom_call.1} parent=5 // pred_fallthru
        _
    $region6: #{tpu_custom_call.1} parent=1 // loop_footer
      %s24 = sadd.s32 1, %s20
    $region7: #{tpu_custom_call.1} parent=1 // loop_footer_branch
      %19 = sbr.rel target = $region3
    $region8: #{tpu_custom_call.1} parent=1 // loop_exit
      _
    %1557 = vsyncpa [#allocation3], 1
    %s1558 = scalar_lea.sflag [#allocation3], 1
    %1559 = vsyncpa %s1558, 1

</llo_original>
